<compile_context>
chip_gen: v5e
topology: v5e:2x2
jax: 0.10.0
libtpu: 0.0.40
codegen_flags: <defaults>
</compile_context>

<pallas_src>
import functools

import jax
import jax.numpy as jnp
from jax.experimental import pallas as pl
from jax.experimental.pallas import tpu as pltpu


# ----------------------------------------------------------------------------
# Fused kernel: all LSTM layers (wavefronted) + MLP head in one invocation.
# ----------------------------------------------------------------------------
def fused_lstm_head_kernel(*refs, num_layers, hidden, seq_len, batch_pad):
    L, H, S, Bp = num_layers, hidden, seq_len, batch_pad
    f32 = jnp.float32

    x_ref = refs[0]                                   # (S*Bp, D) time-major
    lstm_refs = refs[1:1 + 3 * L]
    w1_ref, b1_ref, w2_ref, b2_ref = refs[1 + 3 * L:5 + 3 * L]
    out_ref = refs[5 + 3 * L]

    wih = [lstm_refs[3 * l + 0][...] for l in range(L)]      # (Din_l, 4H)
    whh = [lstm_refs[3 * l + 1][...] for l in range(L)]      # (H, 4H)
    b_row = [lstm_refs[3 * l + 2][...] for l in range(L)]    # (1, 4H)
    # Hoist bias broadcasts out of the recurrence (JAX does not CSE broadcast_in_dim).
    b_full = [jnp.broadcast_to(b, (Bp, 4 * H)) for b in b_row]

    def cell(gates, c_prev):
        # Packed gate order [i, f, o | g]; i/f/o columns pre-scaled by 0.5 offline,
        # so one tanh over the whole (Bp, 4H) block realises sigmoid(x)=0.5*tanh(x/2)+0.5.
        y = jnp.tanh(gates)
        ifo = 0.5 * y[:, :3 * H] + 0.5
        i_g = ifo[:, 0 * H:1 * H]
        f_g = ifo[:, 1 * H:2 * H]
        o_g = ifo[:, 2 * H:3 * H]
        g_g = y[:, 3 * H:]
        c_new = f_g * c_prev + i_g * g_g
        h_new = o_g * jnp.tanh(c_new)
        return h_new, c_new

    # Layer-0 input projection for the whole sequence in one MXU matmul
    # (time-major rows: row = t*Bp + b) -- off the serial chain.
    xp0 = jnp.dot(x_ref[...], wih[0], preferred_element_type=f32) + b_row[0]

    h = [jnp.zeros((Bp, H), f32) for _ in range(L)]
    c = [jnp.zeros((Bp, H), f32) for _ in range(L)]
    xp_pend = [None] * L   # xp_pend[l] (l >= 1): pending input projection for layer l

    # Wavefront over virtual steps: layer l handles time t = u - l. Every layer update
    # in one virtual step reads only previous-step values, so they are independent.
    for u in range(S + L - 1):
        for l in range(L - 1, -1, -1):   # top-down: read old xp_pend before it is overwritten
            t = u - l
            if 0 <= t < S:
                xp_t = xp0[t * Bp:(t + 1) * Bp, :] if l == 0 else xp_pend[l]
                gates = xp_t + jnp.dot(h[l], whh[l], preferred_element_type=f32)
                h[l], c[l] = cell(gates, c[l])
                if l + 1 < L:
                    # Input projection for layer l+1's step t, computed as soon as
                    # h_l[t] exists; consumed at the next virtual step.
                    xp_pend[l + 1] = (jnp.dot(h[l], wih[l + 1],
                                              preferred_element_type=f32)
                                      + b_full[l + 1])

    # Head: Linear(H->32) + ReLU, then the (32->1) matmul as a VPU mul + lane reduce.
    h1 = jnp.dot(h[L - 1], w1_ref[...], preferred_element_type=f32) + b1_ref[...]
    h1 = jnp.maximum(h1, 0.0)
    out_ref[...] = jnp.sum(h1 * w2_ref[...], axis=-1, keepdims=True) + b2_ref[...]


def variational_lstm_forward(x_bsd, packed, num_layers, hidden):
    """x_bsd: (B, S, D) batch-first, like PyTorch nn.LSTM(batch_first=True)."""
    B, S, D = x_bsd.shape
    Bp = ((B + 7) // 8) * 8          # fill vreg sublanes / keep per-step slices 8-aligned

    x = x_bsd.astype(jnp.float32)
    if Bp != B:
        x = jnp.pad(x, ((0, Bp - B), (0, 0), (0, 0)))
    # Time-major 2-D layout: row index = t*Bp + b -> contiguous per-step row blocks.
    x_tm = jnp.transpose(x, (1, 0, 2)).reshape(S * Bp, D)

    args = [x_tm]
    for wih_t, whh_t, b in packed["lstm"]:
        args += [wih_t, whh_t, b]
    args += [packed["w1_t"], packed["b1"], packed["w2_row"], packed["b2"]]

    kernel = functools.partial(fused_lstm_head_kernel, num_layers=num_layers,
                               hidden=hidden, seq_len=S, batch_pad=Bp)
    vmem = lambda: pl.BlockSpec(memory_space=pltpu.MemorySpace.VMEM)
    out = pl.pallas_call(
        kernel,
        out_shape=jax.ShapeDtypeStruct((Bp, 1), jnp.float32),
        in_specs=[vmem() for _ in args],
        out_specs=vmem(),
    )(*args)
    return out[:B]


# ----------------------------------------------------------------------------
# Parameter init (PyTorch layout / gate order) and packing for the kernel.
# ----------------------------------------------------------------------------
def init_raw_params(key, input_size, hidden, num_layers):
    """Raw PyTorch-style params: W_ih (4H, Din), W_hh (4H, H), biases, gate order [i,f,g,o]."""
    raw = {"lstm": []}
    k_lstm = 1.0 / jnp.sqrt(hidden)
    for layer in range(num_layers):
        d_in = input_size if layer == 0 else hidden
        key, k1, k2, k3, k4 = jax.random.split(key, 5)
        w_ih = jax.random.uniform(k1, (4 * hidden, d_in), jnp.float32, -k_lstm, k_lstm)
        w_hh = jax.random.uniform(k2, (4 * hidden, hidden), jnp.float32, -k_lstm, k_lstm)
        b_ih = jax.random.uniform(k3, (4 * hidden,), jnp.float32, -k_lstm, k_lstm)
        b_hh = jax.random.uniform(k4, (4 * hidden,), jnp.float32, -k_lstm, k_lstm)
        raw["lstm"].append((w_ih, w_hh, b_ih, b_hh))

    key, k1, k2, k3, k4 = jax.random.split(key, 5)
    k_l1 = 1.0 / jnp.sqrt(hidden)
    raw["w1"] = jax.random.uniform(k1, (32, hidden), jnp.float32, -k_l1, k_l1)
    raw["b1"] = jax.random.uniform(k2, (32,), jnp.float32, -k_l1, k_l1)
    k_l2 = 1.0 / jnp.sqrt(32.0)
    raw["w2"] = jax.random.uniform(k3, (1, 32), jnp.float32, -k_l2, k_l2)
    raw["b2"] = jax.random.uniform(k4, (1,), jnp.float32, -k_l2, k_l2)
    return raw


def _reorder_gates(w):
    """PyTorch gate order [i, f, g, o] (axis 0) -> kernel order [i, f, o, g]."""
    i, f, g, o = jnp.split(w, 4, axis=0)
    return jnp.concatenate([i, f, o, g], axis=0)


def pack_params(raw):
    """Pre-transpose weights, fuse biases, reorder gates, pre-scale i/f/o by 0.5."""
    packed = {"lstm": []}
    for w_ih, w_hh, b_ih, b_hh in raw["lstm"]:
        wih_t = _reorder_gates(w_ih).T                       # (Din, 4H), cols [i,f,o,g]
        whh_t = _reorder_gates(w_hh).T                       # (H, 4H)
        b = _reorder_gates(b_ih + b_hh)[None, :]             # (1, 4H)
        # Pre-scale i/f/o gate columns by 0.5 so the kernel can run a single tanh
        # over the full gate block: sigmoid(x) = 0.5*tanh(x/2) + 0.5.
        h4 = b.shape[1]
        h = h4 // 4
        scale = jnp.concatenate([jnp.full((3 * h,), 0.5, jnp.float32),
                                 jnp.ones((h,), jnp.float32)])[None, :]
        packed["lstm"].append((wih_t * scale, whh_t * scale, b * scale))
    packed["w1_t"] = raw["w1"].T                             # (H, 32)
    packed["b1"] = raw["b1"][None, :]                        # (1, 32)
    packed["w2_row"] = raw["w2"]                             # (1, 32) used as VPU row
    packed["b2"] = raw["b2"][None, :]                        # (1, 1)
    return packed


# ----------------------------------------------------------------------------
# Pure JAX reference with the original PyTorch semantics (gate order i,f,g,o).
# ----------------------------------------------------------------------------
def reference_forward(x_bsd, raw, num_layers, hidden):
    B = x_bsd.shape[0]
    seq = jnp.transpose(x_bsd, (1, 0, 2)).astype(jnp.float32)   # (S, B, D)
    for layer in range(num_layers):
        w_ih, w_hh, b_ih, b_hh = raw["lstm"][layer]

        def step(carry, x_t, w_ih=w_ih, w_hh=w_hh, b_ih=b_ih, b_hh=b_hh):
            h_prev, c_prev = carry
            gates = x_t @ w_ih.T + h_prev @ w_hh.T + b_ih + b_hh
            i_g = jax.nn.sigmoid(gates[:, 0 * hidden:1 * hidden])
            f_g = jax.nn.sigmoid(gates[:, 1 * hidden:2 * hidden])
            g_g = jnp.tanh(gates[:, 2 * hidden:3 * hidden])
            o_g = jax.nn.sigmoid(gates[:, 3 * hidden:4 * hidden])
            c_new = f_g * c_prev + i_g * g_g
            h_new = o_g * jnp.tanh(c_new)
            return (h_new, c_new), h_new

        init = (jnp.zeros((B, hidden), jnp.float32), jnp.zeros((B, hidden), jnp.float32))
        _, seq = jax.lax.scan(step, init, seq)
    hn = seq[-1]                                             # hn[-1] of last layer
    h1 = jnp.maximum(hn @ raw["w1"].T + raw["b1"], 0.0)
    return h1 @ raw["w2"].T + raw["b2"]


if __name__ == "__main__":
    # architecture: input_layer_size=8, num_rnn_layers=2, num_rnn_hidden=32
    BATCH, SEQ, INPUT, HIDDEN, LAYERS = 2, 8, 8, 32, 2

    key = jax.random.PRNGKey(0)
    k_x, k_p = jax.random.split(key)
    x = jax.random.normal(k_x, (BATCH, SEQ, INPUT), jnp.float32)   # (B, S, D) batch-first
    raw = init_raw_params(k_p, INPUT, HIDDEN, LAYERS)
    packed = pack_params(raw)

    out = variational_lstm_forward(x, packed, LAYERS, HIDDEN)
    out = jax.block_until_ready(out)
    assert out.shape == (BATCH, 1), out.shape

    ref = jax.block_until_ready(reference_forward(x, raw, LAYERS, HIDDEN))
    assert jnp.allclose(out, ref, atol=2e-5, rtol=2e-5), (out, ref)

    print("KERNEL_OK")
</pallas_src>

<mosaic_0001>
module attributes {stable_mosaic.version = 11 : i64} {
  func.func @fused_lstm_head_kernel(%arg0: memref<64x8xf32, #tpu.memory_space<vmem>>, %arg1: memref<8x128xf32, #tpu.memory_space<vmem>>, %arg2: memref<32x128xf32, #tpu.memory_space<vmem>>, %arg3: memref<1x128xf32, #tpu.memory_space<vmem>>, %arg4: memref<32x128xf32, #tpu.memory_space<vmem>>, %arg5: memref<32x128xf32, #tpu.memory_space<vmem>>, %arg6: memref<1x128xf32, #tpu.memory_space<vmem>>, %arg7: memref<32x32xf32, #tpu.memory_space<vmem>>, %arg8: memref<1x32xf32, #tpu.memory_space<vmem>>, %arg9: memref<1x32xf32, #tpu.memory_space<vmem>>, %arg10: memref<1x1xf32, #tpu.memory_space<vmem>>, %arg11: memref<8x1xf32, #tpu.memory_space<vmem>>) attributes {dimension_semantics = [], scalar_prefetch = 0 : i64, scratch_operands = 0 : i64, tpu.core_type = #tpu.core_type<tc>} {
    %c0 = arith.constant 0 : index
    %c0_0 = arith.constant 0 : index
    %0 = vector.load %arg1[%c0, %c0_0] : memref<8x128xf32, #tpu.memory_space<vmem>>, vector<8x128xf32>
    %c0_1 = arith.constant 0 : index
    %c0_2 = arith.constant 0 : index
    %1 = vector.load %arg4[%c0_1, %c0_2] : memref<32x128xf32, #tpu.memory_space<vmem>>, vector<32x128xf32>
    %c0_3 = arith.constant 0 : index
    %c0_4 = arith.constant 0 : index
    %2 = vector.load %arg2[%c0_3, %c0_4] : memref<32x128xf32, #tpu.memory_space<vmem>>, vector<32x128xf32>
    %c0_5 = arith.constant 0 : index
    %c0_6 = arith.constant 0 : index
    %3 = vector.load %arg5[%c0_5, %c0_6] : memref<32x128xf32, #tpu.memory_space<vmem>>, vector<32x128xf32>
    %c0_7 = arith.constant 0 : index
    %c0_8 = arith.constant 0 : index
    %4 = vector.load %arg3[%c0_7, %c0_8] : memref<1x128xf32, #tpu.memory_space<vmem>>, vector<1x128xf32>
    %c0_9 = arith.constant 0 : index
    %c0_10 = arith.constant 0 : index
    %5 = vector.load %arg6[%c0_9, %c0_10] : memref<1x128xf32, #tpu.memory_space<vmem>>, vector<1x128xf32>
    %6 = vector.shape_cast %5 : vector<1x128xf32> to vector<1x128xf32>
    %7 = vector.broadcast %6 : vector<1x128xf32> to vector<8x128xf32>
    %c0_11 = arith.constant 0 : index
    %c0_12 = arith.constant 0 : index
    %8 = vector.load %arg0[%c0_11, %c0_12] : memref<64x8xf32, #tpu.memory_space<vmem>>, vector<64x8xf32>
    %cst = arith.constant dense<0.000000e+00> : vector<64x128xf32>
    %9 = tpu.matmul %8, %0, %cst {dimension_numbers = #tpu.dot_dimension_numbers<[1], [0], [0], [1], [0, 0, 1, 1], [], []>} : vector<64x8xf32>, vector<8x128xf32>, vector<64x128xf32> -> vector<64x128xf32>
    %10 = vector.broadcast %4 : vector<1x128xf32> to vector<64x128xf32>
    %11 = arith.addf %9, %10 : vector<64x128xf32>
    %cst_13 = arith.constant 0.000000e+00 : f32
    %12 = vector.broadcast %cst_13 : f32 to vector<8x32xf32>
    %cst_14 = arith.constant 0.000000e+00 : f32
    %13 = vector.broadcast %cst_14 : f32 to vector<8x32xf32>
    %cst_15 = arith.constant 0.000000e+00 : f32
    %14 = vector.broadcast %cst_15 : f32 to vector<8x32xf32>
    %cst_16 = arith.constant 0.000000e+00 : f32
    %15 = vector.broadcast %cst_16 : f32 to vector<8x32xf32>
    %16 = vector.extract_strided_slice %11 {offsets = [0, 0], sizes = [8, 128], strides = [1, 1]} : vector<64x128xf32> to vector<8x128xf32>
    %cst_17 = arith.constant dense<0.000000e+00> : vector<8x128xf32>
    %17 = tpu.matmul %12, %2, %cst_17 {dimension_numbers = #tpu.dot_dimension_numbers<[1], [0], [0], [1], [0, 0, 1, 1], [], []>} : vector<8x32xf32>, vector<32x128xf32>, vector<8x128xf32> -> vector<8x128xf32>
    %18 = arith.addf %16, %17 : vector<8x128xf32>
    %19 = math.tanh %18 : vector<8x128xf32>
    %20 = vector.extract_strided_slice %19 {offsets = [0, 0], sizes = [8, 96], strides = [1, 1]} : vector<8x128xf32> to vector<8x96xf32>
    %cst_18 = arith.constant 5.000000e-01 : f32
    %21 = vector.broadcast %cst_18 : f32 to vector<8x96xf32>
    %22 = arith.mulf %21, %20 : vector<8x96xf32>
    %cst_19 = arith.constant 5.000000e-01 : f32
    %23 = vector.broadcast %cst_19 : f32 to vector<8x96xf32>
    %24 = arith.addf %22, %23 : vector<8x96xf32>
    %25 = vector.extract_strided_slice %24 {offsets = [0, 0], sizes = [8, 32], strides = [1, 1]} : vector<8x96xf32> to vector<8x32xf32>
    %26 = vector.extract_strided_slice %24 {offsets = [0, 32], sizes = [8, 32], strides = [1, 1]} : vector<8x96xf32> to vector<8x32xf32>
    %27 = vector.extract_strided_slice %24 {offsets = [0, 64], sizes = [8, 32], strides = [1, 1]} : vector<8x96xf32> to vector<8x32xf32>
    %28 = vector.extract_strided_slice %19 {offsets = [0, 96], sizes = [8, 32], strides = [1, 1]} : vector<8x128xf32> to vector<8x32xf32>
    %29 = arith.mulf %26, %14 : vector<8x32xf32>
    %30 = arith.mulf %25, %28 : vector<8x32xf32>
    %31 = arith.addf %29, %30 : vector<8x32xf32>
    %32 = math.tanh %31 : vector<8x32xf32>
    %33 = arith.mulf %27, %32 : vector<8x32xf32>
    %cst_20 = arith.constant dense<0.000000e+00> : vector<8x128xf32>
    %34 = tpu.matmul %33, %1, %cst_20 {dimension_numbers = #tpu.dot_dimension_numbers<[1], [0], [0], [1], [0, 0, 1, 1], [], []>} : vector<8x32xf32>, vector<32x128xf32>, vector<8x128xf32> -> vector<8x128xf32>
    %35 = arith.addf %34, %7 : vector<8x128xf32>
    %cst_21 = arith.constant dense<0.000000e+00> : vector<8x128xf32>
    %36 = tpu.matmul %13, %3, %cst_21 {dimension_numbers = #tpu.dot_dimension_numbers<[1], [0], [0], [1], [0, 0, 1, 1], [], []>} : vector<8x32xf32>, vector<32x128xf32>, vector<8x128xf32> -> vector<8x128xf32>
    %37 = arith.addf %35, %36 : vector<8x128xf32>
    %38 = math.tanh %37 : vector<8x128xf32>
    %39 = vector.extract_strided_slice %38 {offsets = [0, 0], sizes = [8, 96], strides = [1, 1]} : vector<8x128xf32> to vector<8x96xf32>
    %cst_22 = arith.constant 5.000000e-01 : f32
    %40 = vector.broadcast %cst_22 : f32 to vector<8x96xf32>
    %41 = arith.mulf %40, %39 : vector<8x96xf32>
    %cst_23 = arith.constant 5.000000e-01 : f32
    %42 = vector.broadcast %cst_23 : f32 to vector<8x96xf32>
    %43 = arith.addf %41, %42 : vector<8x96xf32>
    %44 = vector.extract_strided_slice %43 {offsets = [0, 0], sizes = [8, 32], strides = [1, 1]} : vector<8x96xf32> to vector<8x32xf32>
    %45 = vector.extract_strided_slice %43 {offsets = [0, 32], sizes = [8, 32], strides = [1, 1]} : vector<8x96xf32> to vector<8x32xf32>
    %46 = vector.extract_strided_slice %43 {offsets = [0, 64], sizes = [8, 32], strides = [1, 1]} : vector<8x96xf32> to vector<8x32xf32>
    %47 = vector.extract_strided_slice %38 {offsets = [0, 96], sizes = [8, 32], strides = [1, 1]} : vector<8x128xf32> to vector<8x32xf32>
    %48 = arith.mulf %45, %15 : vector<8x32xf32>
    %49 = arith.mulf %44, %47 : vector<8x32xf32>
    %50 = arith.addf %48, %49 : vector<8x32xf32>
    %51 = math.tanh %50 : vector<8x32xf32>
    %52 = arith.mulf %46, %51 : vector<8x32xf32>
    %53 = vector.extract_strided_slice %11 {offsets = [8, 0], sizes = [8, 128], strides = [1, 1]} : vector<64x128xf32> to vector<8x128xf32>
    %cst_24 = arith.constant dense<0.000000e+00> : vector<8x128xf32>
    %54 = tpu.matmul %33, %2, %cst_24 {dimension_numbers = #tpu.dot_dimension_numbers<[1], [0], [0], [1], [0, 0, 1, 1], [], []>} : vector<8x32xf32>, vector<32x128xf32>, vector<8x128xf32> -> vector<8x128xf32>
    %55 = arith.addf %53, %54 : vector<8x128xf32>
    %56 = math.tanh %55 : vector<8x128xf32>
    %57 = vector.extract_strided_slice %56 {offsets = [0, 0], sizes = [8, 96], strides = [1, 1]} : vector<8x128xf32> to vector<8x96xf32>
    %cst_25 = arith.constant 5.000000e-01 : f32
    %58 = vector.broadcast %cst_25 : f32 to vector<8x96xf32>
    %59 = arith.mulf %58, %57 : vector<8x96xf32>
    %cst_26 = arith.constant 5.000000e-01 : f32
    %60 = vector.broadcast %cst_26 : f32 to vector<8x96xf32>
    %61 = arith.addf %59, %60 : vector<8x96xf32>
    %62 = vector.extract_strided_slice %61 {offsets = [0, 0], sizes = [8, 32], strides = [1, 1]} : vector<8x96xf32> to vector<8x32xf32>
    %63 = vector.extract_strided_slice %61 {offsets = [0, 32], sizes = [8, 32], strides = [1, 1]} : vector<8x96xf32> to vector<8x32xf32>
    %64 = vector.extract_strided_slice %61 {offsets = [0, 64], sizes = [8, 32], strides = [1, 1]} : vector<8x96xf32> to vector<8x32xf32>
    %65 = vector.extract_strided_slice %56 {offsets = [0, 96], sizes = [8, 32], strides = [1, 1]} : vector<8x128xf32> to vector<8x32xf32>
    %66 = arith.mulf %63, %31 : vector<8x32xf32>
    %67 = arith.mulf %62, %65 : vector<8x32xf32>
    %68 = arith.addf %66, %67 : vector<8x32xf32>
    %69 = math.tanh %68 : vector<8x32xf32>
    %70 = arith.mulf %64, %69 : vector<8x32xf32>
    %cst_27 = arith.constant dense<0.000000e+00> : vector<8x128xf32>
    %71 = tpu.matmul %70, %1, %cst_27 {dimension_numbers = #tpu.dot_dimension_numbers<[1], [0], [0], [1], [0, 0, 1, 1], [], []>} : vector<8x32xf32>, vector<32x128xf32>, vector<8x128xf32> -> vector<8x128xf32>
    %72 = arith.addf %71, %7 : vector<8x128xf32>
    %cst_28 = arith.constant dense<0.000000e+00> : vector<8x128xf32>
    %73 = tpu.matmul %52, %3, %cst_28 {dimension_numbers = #tpu.dot_dimension_numbers<[1], [0], [0], [1], [0, 0, 1, 1], [], []>} : vector<8x32xf32>, vector<32x128xf32>, vector<8x128xf32> -> vector<8x128xf32>
    %74 = arith.addf %72, %73 : vector<8x128xf32>
    %75 = math.tanh %74 : vector<8x128xf32>
    %76 = vector.extract_strided_slice %75 {offsets = [0, 0], sizes = [8, 96], strides = [1, 1]} : vector<8x128xf32> to vector<8x96xf32>
    %cst_29 = arith.constant 5.000000e-01 : f32
    %77 = vector.broadcast %cst_29 : f32 to vector<8x96xf32>
    %78 = arith.mulf %77, %76 : vector<8x96xf32>
    %cst_30 = arith.constant 5.000000e-01 : f32
    %79 = vector.broadcast %cst_30 : f32 to vector<8x96xf32>
    %80 = arith.addf %78, %79 : vector<8x96xf32>
    %81 = vector.extract_strided_slice %80 {offsets = [0, 0], sizes = [8, 32], strides = [1, 1]} : vector<8x96xf32> to vector<8x32xf32>
    %82 = vector.extract_strided_slice %80 {offsets = [0, 32], sizes = [8, 32], strides = [1, 1]} : vector<8x96xf32> to vector<8x32xf32>
    %83 = vector.extract_strided_slice %80 {offsets = [0, 64], sizes = [8, 32], strides = [1, 1]} : vector<8x96xf32> to vector<8x32xf32>
    %84 = vector.extract_strided_slice %75 {offsets = [0, 96], sizes = [8, 32], strides = [1, 1]} : vector<8x128xf32> to vector<8x32xf32>
    %85 = arith.mulf %82, %50 : vector<8x32xf32>
    %86 = arith.mulf %81, %84 : vector<8x32xf32>
    %87 = arith.addf %85, %86 : vector<8x32xf32>
    %88 = math.tanh %87 : vector<8x32xf32>
    %89 = arith.mulf %83, %88 : vector<8x32xf32>
    %90 = vector.extract_strided_slice %11 {offsets = [16, 0], sizes = [8, 128], strides = [1, 1]} : vector<64x128xf32> to vector<8x128xf32>
    %cst_31 = arith.constant dense<0.000000e+00> : vector<8x128xf32>
    %91 = tpu.matmul %70, %2, %cst_31 {dimension_numbers = #tpu.dot_dimension_numbers<[1], [0], [0], [1], [0, 0, 1, 1], [], []>} : vector<8x32xf32>, vector<32x128xf32>, vector<8x128xf32> -> vector<8x128xf32>
    %92 = arith.addf %90, %91 : vector<8x128xf32>
    %93 = math.tanh %92 : vector<8x128xf32>
    %94 = vector.extract_strided_slice %93 {offsets = [0, 0], sizes = [8, 96], strides = [1, 1]} : vector<8x128xf32> to vector<8x96xf32>
    %cst_32 = arith.constant 5.000000e-01 : f32
    %95 = vector.broadcast %cst_32 : f32 to vector<8x96xf32>
    %96 = arith.mulf %95, %94 : vector<8x96xf32>
    %cst_33 = arith.constant 5.000000e-01 : f32
    %97 = vector.broadcast %cst_33 : f32 to vector<8x96xf32>
    %98 = arith.addf %96, %97 : vector<8x96xf32>
    %99 = vector.extract_strided_slice %98 {offsets = [0, 0], sizes = [8, 32], strides = [1, 1]} : vector<8x96xf32> to vector<8x32xf32>
    %100 = vector.extract_strided_slice %98 {offsets = [0, 32], sizes = [8, 32], strides = [1, 1]} : vector<8x96xf32> to vector<8x32xf32>
    %101 = vector.extract_strided_slice %98 {offsets = [0, 64], sizes = [8, 32], strides = [1, 1]} : vector<8x96xf32> to vector<8x32xf32>
    %102 = vector.extract_strided_slice %93 {offsets = [0, 96], sizes = [8, 32], strides = [1, 1]} : vector<8x128xf32> to vector<8x32xf32>
    %103 = arith.mulf %100, %68 : vector<8x32xf32>
    %104 = arith.mulf %99, %102 : vector<8x32xf32>
    %105 = arith.addf %103, %104 : vector<8x32xf32>
    %106 = math.tanh %105 : vector<8x32xf32>
    %107 = arith.mulf %101, %106 : vector<8x32xf32>
    %cst_34 = arith.constant dense<0.000000e+00> : vector<8x128xf32>
    %108 = tpu.matmul %107, %1, %cst_34 {dimension_numbers = #tpu.dot_dimension_numbers<[1], [0], [0], [1], [0, 0, 1, 1], [], []>} : vector<8x32xf32>, vector<32x128xf32>, vector<8x128xf32> -> vector<8x128xf32>
    %109 = arith.addf %108, %7 : vector<8x128xf32>
    %cst_35 = arith.constant dense<0.000000e+00> : vector<8x128xf32>
    %110 = tpu.matmul %89, %3, %cst_35 {dimension_numbers = #tpu.dot_dimension_numbers<[1], [0], [0], [1], [0, 0, 1, 1], [], []>} : vector<8x32xf32>, vector<32x128xf32>, vector<8x128xf32> -> vector<8x128xf32>
    %111 = arith.addf %109, %110 : vector<8x128xf32>
    %112 = math.tanh %111 : vector<8x128xf32>
    %113 = vector.extract_strided_slice %112 {offsets = [0, 0], sizes = [8, 96], strides = [1, 1]} : vector<8x128xf32> to vector<8x96xf32>
    %cst_36 = arith.constant 5.000000e-01 : f32
    %114 = vector.broadcast %cst_36 : f32 to vector<8x96xf32>
    %115 = arith.mulf %114, %113 : vector<8x96xf32>
    %cst_37 = arith.constant 5.000000e-01 : f32
    %116 = vector.broadcast %cst_37 : f32 to vector<8x96xf32>
    %117 = arith.addf %115, %116 : vector<8x96xf32>
    %118 = vector.extract_strided_slice %117 {offsets = [0, 0], sizes = [8, 32], strides = [1, 1]} : vector<8x96xf32> to vector<8x32xf32>
    %119 = vector.extract_strided_slice %117 {offsets = [0, 32], sizes = [8, 32], strides = [1, 1]} : vector<8x96xf32> to vector<8x32xf32>
    %120 = vector.extract_strided_slice %117 {offsets = [0, 64], sizes = [8, 32], strides = [1, 1]} : vector<8x96xf32> to vector<8x32xf32>
    %121 = vector.extract_strided_slice %112 {offsets = [0, 96], sizes = [8, 32], strides = [1, 1]} : vector<8x128xf32> to vector<8x32xf32>
    %122 = arith.mulf %119, %87 : vector<8x32xf32>
    %123 = arith.mulf %118, %121 : vector<8x32xf32>
    %124 = arith.addf %122, %123 : vector<8x32xf32>
    %125 = math.tanh %124 : vector<8x32xf32>
    %126 = arith.mulf %120, %125 : vector<8x32xf32>
    %127 = vector.extract_strided_slice %11 {offsets = [24, 0], sizes = [8, 128], strides = [1, 1]} : vector<64x128xf32> to vector<8x128xf32>
    %cst_38 = arith.constant dense<0.000000e+00> : vector<8x128xf32>
    %128 = tpu.matmul %107, %2, %cst_38 {dimension_numbers = #tpu.dot_dimension_numbers<[1], [0], [0], [1], [0, 0, 1, 1], [], []>} : vector<8x32xf32>, vector<32x128xf32>, vector<8x128xf32> -> vector<8x128xf32>
    %129 = arith.addf %127, %128 : vector<8x128xf32>
    %130 = math.tanh %129 : vector<8x128xf32>
    %131 = vector.extract_strided_slice %130 {offsets = [0, 0], sizes = [8, 96], strides = [1, 1]} : vector<8x128xf32> to vector<8x96xf32>
    %cst_39 = arith.constant 5.000000e-01 : f32
    %132 = vector.broadcast %cst_39 : f32 to vector<8x96xf32>
    %133 = arith.mulf %132, %131 : vector<8x96xf32>
    %cst_40 = arith.constant 5.000000e-01 : f32
    %134 = vector.broadcast %cst_40 : f32 to vector<8x96xf32>
    %135 = arith.addf %133, %134 : vector<8x96xf32>
    %136 = vector.extract_strided_slice %135 {offsets = [0, 0], sizes = [8, 32], strides = [1, 1]} : vector<8x96xf32> to vector<8x32xf32>
    %137 = vector.extract_strided_slice %135 {offsets = [0, 32], sizes = [8, 32], strides = [1, 1]} : vector<8x96xf32> to vector<8x32xf32>
    %138 = vector.extract_strided_slice %135 {offsets = [0, 64], sizes = [8, 32], strides = [1, 1]} : vector<8x96xf32> to vector<8x32xf32>
    %139 = vector.extract_strided_slice %130 {offsets = [0, 96], sizes = [8, 32], strides = [1, 1]} : vector<8x128xf32> to vector<8x32xf32>
    %140 = arith.mulf %137, %105 : vector<8x32xf32>
    %141 = arith.mulf %136, %139 : vector<8x32xf32>
    %142 = arith.addf %140, %141 : vector<8x32xf32>
    %143 = math.tanh %142 : vector<8x32xf32>
    %144 = arith.mulf %138, %143 : vector<8x32xf32>
    %cst_41 = arith.constant dense<0.000000e+00> : vector<8x128xf32>
    %145 = tpu.matmul %144, %1, %cst_41 {dimension_numbers = #tpu.dot_dimension_numbers<[1], [0], [0], [1], [0, 0, 1, 1], [], []>} : vector<8x32xf32>, vector<32x128xf32>, vector<8x128xf32> -> vector<8x128xf32>
    %146 = arith.addf %145, %7 : vector<8x128xf32>
    %cst_42 = arith.constant dense<0.000000e+00> : vector<8x128xf32>
    %147 = tpu.matmul %126, %3, %cst_42 {dimension_numbers = #tpu.dot_dimension_numbers<[1], [0], [0], [1], [0, 0, 1, 1], [], []>} : vector<8x32xf32>, vector<32x128xf32>, vector<8x128xf32> -> vector<8x128xf32>
    %148 = arith.addf %146, %147 : vector<8x128xf32>
    %149 = math.tanh %148 : vector<8x128xf32>
    %150 = vector.extract_strided_slice %149 {offsets = [0, 0], sizes = [8, 96], strides = [1, 1]} : vector<8x128xf32> to vector<8x96xf32>
    %cst_43 = arith.constant 5.000000e-01 : f32
    %151 = vector.broadcast %cst_43 : f32 to vector<8x96xf32>
    %152 = arith.mulf %151, %150 : vector<8x96xf32>
    %cst_44 = arith.constant 5.000000e-01 : f32
    %153 = vector.broadcast %cst_44 : f32 to vector<8x96xf32>
    %154 = arith.addf %152, %153 : vector<8x96xf32>
    %155 = vector.extract_strided_slice %154 {offsets = [0, 0], sizes = [8, 32], strides = [1, 1]} : vector<8x96xf32> to vector<8x32xf32>
    %156 = vector.extract_strided_slice %154 {offsets = [0, 32], sizes = [8, 32], strides = [1, 1]} : vector<8x96xf32> to vector<8x32xf32>
    %157 = vector.extract_strided_slice %154 {offsets = [0, 64], sizes = [8, 32], strides = [1, 1]} : vector<8x96xf32> to vector<8x32xf32>
    %158 = vector.extract_strided_slice %149 {offsets = [0, 96], sizes = [8, 32], strides = [1, 1]} : vector<8x128xf32> to vector<8x32xf32>
    %159 = arith.mulf %156, %124 : vector<8x32xf32>
    %160 = arith.mulf %155, %158 : vector<8x32xf32>
    %161 = arith.addf %159, %160 : vector<8x32xf32>
    %162 = math.tanh %161 : vector<8x32xf32>
    %163 = arith.mulf %157, %162 : vector<8x32xf32>
    %164 = vector.extract_strided_slice %11 {offsets = [32, 0], sizes = [8, 128], strides = [1, 1]} : vector<64x128xf32> to vector<8x128xf32>
    %cst_45 = arith.constant dense<0.000000e+00> : vector<8x128xf32>
    %165 = tpu.matmul %144, %2, %cst_45 {dimension_numbers = #tpu.dot_dimension_numbers<[1], [0], [0], [1], [0, 0, 1, 1], [], []>} : vector<8x32xf32>, vector<32x128xf32>, vector<8x128xf32> -> vector<8x128xf32>
    %166 = arith.addf %164, %165 : vector<8x128xf32>
    %167 = math.tanh %166 : vector<8x128xf32>
    %168 = vector.extract_strided_slice %167 {offsets = [0, 0], sizes = [8, 96], strides = [1, 1]} : vector<8x128xf32> to vector<8x96xf32>
    %cst_46 = arith.constant 5.000000e-01 : f32
    %169 = vector.broadcast %cst_46 : f32 to vector<8x96xf32>
    %170 = arith.mulf %169, %168 : vector<8x96xf32>
    %cst_47 = arith.constant 5.000000e-01 : f32
    %171 = vector.broadcast %cst_47 : f32 to vector<8x96xf32>
    %172 = arith.addf %170, %171 : vector<8x96xf32>
    %173 = vector.extract_strided_slice %172 {offsets = [0, 0], sizes = [8, 32], strides = [1, 1]} : vector<8x96xf32> to vector<8x32xf32>
    %174 = vector.extract_strided_slice %172 {offsets = [0, 32], sizes = [8, 32], strides = [1, 1]} : vector<8x96xf32> to vector<8x32xf32>
    %175 = vector.extract_strided_slice %172 {offsets = [0, 64], sizes = [8, 32], strides = [1, 1]} : vector<8x96xf32> to vector<8x32xf32>
    %176 = vector.extract_strided_slice %167 {offsets = [0, 96], sizes = [8, 32], strides = [1, 1]} : vector<8x128xf32> to vector<8x32xf32>
    %177 = arith.mulf %174, %142 : vector<8x32xf32>
    %178 = arith.mulf %173, %176 : vector<8x32xf32>
    %179 = arith.addf %177, %178 : vector<8x32xf32>
    %180 = math.tanh %179 : vector<8x32xf32>
    %181 = arith.mulf %175, %180 : vector<8x32xf32>
    %cst_48 = arith.constant dense<0.000000e+00> : vector<8x128xf32>
    %182 = tpu.matmul %181, %1, %cst_48 {dimension_numbers = #tpu.dot_dimension_numbers<[1], [0], [0], [1], [0, 0, 1, 1], [], []>} : vector<8x32xf32>, vector<32x128xf32>, vector<8x128xf32> -> vector<8x128xf32>
    %183 = arith.addf %182, %7 : vector<8x128xf32>
    %cst_49 = arith.constant dense<0.000000e+00> : vector<8x128xf32>
    %184 = tpu.matmul %163, %3, %cst_49 {dimension_numbers = #tpu.dot_dimension_numbers<[1], [0], [0], [1], [0, 0, 1, 1], [], []>} : vector<8x32xf32>, vector<32x128xf32>, vector<8x128xf32> -> vector<8x128xf32>
    %185 = arith.addf %183, %184 : vector<8x128xf32>
    %186 = math.tanh %185 : vector<8x128xf32>
    %187 = vector.extract_strided_slice %186 {offsets = [0, 0], sizes = [8, 96], strides = [1, 1]} : vector<8x128xf32> to vector<8x96xf32>
    %cst_50 = arith.constant 5.000000e-01 : f32
    %188 = vector.broadcast %cst_50 : f32 to vector<8x96xf32>
    %189 = arith.mulf %188, %187 : vector<8x96xf32>
    %cst_51 = arith.constant 5.000000e-01 : f32
    %190 = vector.broadcast %cst_51 : f32 to vector<8x96xf32>
    %191 = arith.addf %189, %190 : vector<8x96xf32>
    %192 = vector.extract_strided_slice %191 {offsets = [0, 0], sizes = [8, 32], strides = [1, 1]} : vector<8x96xf32> to vector<8x32xf32>
    %193 = vector.extract_strided_slice %191 {offsets = [0, 32], sizes = [8, 32], strides = [1, 1]} : vector<8x96xf32> to vector<8x32xf32>
    %194 = vector.extract_strided_slice %191 {offsets = [0, 64], sizes = [8, 32], strides = [1, 1]} : vector<8x96xf32> to vector<8x32xf32>
    %195 = vector.extract_strided_slice %186 {offsets = [0, 96], sizes = [8, 32], strides = [1, 1]} : vector<8x128xf32> to vector<8x32xf32>
    %196 = arith.mulf %193, %161 : vector<8x32xf32>
    %197 = arith.mulf %192, %195 : vector<8x32xf32>
    %198 = arith.addf %196, %197 : vector<8x32xf32>
    %199 = math.tanh %198 : vector<8x32xf32>
    %200 = arith.mulf %194, %199 : vector<8x32xf32>
    %201 = vector.extract_strided_slice %11 {offsets = [40, 0], sizes = [8, 128], strides = [1, 1]} : vector<64x128xf32> to vector<8x128xf32>
    %cst_52 = arith.constant dense<0.000000e+00> : vector<8x128xf32>
    %202 = tpu.matmul %181, %2, %cst_52 {dimension_numbers = #tpu.dot_dimension_numbers<[1], [0], [0], [1], [0, 0, 1, 1], [], []>} : vector<8x32xf32>, vector<32x128xf32>, vector<8x128xf32> -> vector<8x128xf32>
    %203 = arith.addf %201, %202 : vector<8x128xf32>
    %204 = math.tanh %203 : vector<8x128xf32>
    %205 = vector.extract_strided_slice %204 {offsets = [0, 0], sizes = [8, 96], strides = [1, 1]} : vector<8x128xf32> to vector<8x96xf32>
    %cst_53 = arith.constant 5.000000e-01 : f32
    %206 = vector.broadcast %cst_53 : f32 to vector<8x96xf32>
    %207 = arith.mulf %206, %205 : vector<8x96xf32>
    %cst_54 = arith.constant 5.000000e-01 : f32
    %208 = vector.broadcast %cst_54 : f32 to vector<8x96xf32>
    %209 = arith.addf %207, %208 : vector<8x96xf32>
    %210 = vector.extract_strided_slice %209 {offsets = [0, 0], sizes = [8, 32], strides = [1, 1]} : vector<8x96xf32> to vector<8x32xf32>
    %211 = vector.extract_strided_slice %209 {offsets = [0, 32], sizes = [8, 32], strides = [1, 1]} : vector<8x96xf32> to vector<8x32xf32>
    %212 = vector.extract_strided_slice %209 {offsets = [0, 64], sizes = [8, 32], strides = [1, 1]} : vector<8x96xf32> to vector<8x32xf32>
    %213 = vector.extract_strided_slice %204 {offsets = [0, 96], sizes = [8, 32], strides = [1, 1]} : vector<8x128xf32> to vector<8x32xf32>
    %214 = arith.mulf %211, %179 : vector<8x32xf32>
    %215 = arith.mulf %210, %213 : vector<8x32xf32>
    %216 = arith.addf %214, %215 : vector<8x32xf32>
    %217 = math.tanh %216 : vector<8x32xf32>
    %218 = arith.mulf %212, %217 : vector<8x32xf32>
    %cst_55 = arith.constant dense<0.000000e+00> : vector<8x128xf32>
    %219 = tpu.matmul %218, %1, %cst_55 {dimension_numbers = #tpu.dot_dimension_numbers<[1], [0], [0], [1], [0, 0, 1, 1], [], []>} : vector<8x32xf32>, vector<32x128xf32>, vector<8x128xf32> -> vector<8x128xf32>
    %220 = arith.addf %219, %7 : vector<8x128xf32>
    %cst_56 = arith.constant dense<0.000000e+00> : vector<8x128xf32>
    %221 = tpu.matmul %200, %3, %cst_56 {dimension_numbers = #tpu.dot_dimension_numbers<[1], [0], [0], [1], [0, 0, 1, 1], [], []>} : vector<8x32xf32>, vector<32x128xf32>, vector<8x128xf32> -> vector<8x128xf32>
    %222 = arith.addf %220, %221 : vector<8x128xf32>
    %223 = math.tanh %222 : vector<8x128xf32>
    %224 = vector.extract_strided_slice %223 {offsets = [0, 0], sizes = [8, 96], strides = [1, 1]} : vector<8x128xf32> to vector<8x96xf32>
    %cst_57 = arith.constant 5.000000e-01 : f32
    %225 = vector.broadcast %cst_57 : f32 to vector<8x96xf32>
    %226 = arith.mulf %225, %224 : vector<8x96xf32>
    %cst_58 = arith.constant 5.000000e-01 : f32
    %227 = vector.broadcast %cst_58 : f32 to vector<8x96xf32>
    %228 = arith.addf %226, %227 : vector<8x96xf32>
    %229 = vector.extract_strided_slice %228 {offsets = [0, 0], sizes = [8, 32], strides = [1, 1]} : vector<8x96xf32> to vector<8x32xf32>
    %230 = vector.extract_strided_slice %228 {offsets = [0, 32], sizes = [8, 32], strides = [1, 1]} : vector<8x96xf32> to vector<8x32xf32>
    %231 = vector.extract_strided_slice %228 {offsets = [0, 64], sizes = [8, 32], strides = [1, 1]} : vector<8x96xf32> to vector<8x32xf32>
    %232 = vector.extract_strided_slice %223 {offsets = [0, 96], sizes = [8, 32], strides = [1, 1]} : vector<8x128xf32> to vector<8x32xf32>
    %233 = arith.mulf %230, %198 : vector<8x32xf32>
    %234 = arith.mulf %229, %232 : vector<8x32xf32>
    %235 = arith.addf %233, %234 : vector<8x32xf32>
    %236 = math.tanh %235 : vector<8x32xf32>
    %237 = arith.mulf %231, %236 : vector<8x32xf32>
    %238 = vector.extract_strided_slice %11 {offsets = [48, 0], sizes = [8, 128], strides = [1, 1]} : vector<64x128xf32> to vector<8x128xf32>
    %cst_59 = arith.constant dense<0.000000e+00> : vector<8x128xf32>
    %239 = tpu.matmul %218, %2, %cst_59 {dimension_numbers = #tpu.dot_dimension_numbers<[1], [0], [0], [1], [0, 0, 1, 1], [], []>} : vector<8x32xf32>, vector<32x128xf32>, vector<8x128xf32> -> vector<8x128xf32>
    %240 = arith.addf %238, %239 : vector<8x128xf32>
    %241 = math.tanh %240 : vector<8x128xf32>
    %242 = vector.extract_strided_slice %241 {offsets = [0, 0], sizes = [8, 96], strides = [1, 1]} : vector<8x128xf32> to vector<8x96xf32>
    %cst_60 = arith.constant 5.000000e-01 : f32
    %243 = vector.broadcast %cst_60 : f32 to vector<8x96xf32>
    %244 = arith.mulf %243, %242 : vector<8x96xf32>
    %cst_61 = arith.constant 5.000000e-01 : f32
    %245 = vector.broadcast %cst_61 : f32 to vector<8x96xf32>
    %246 = arith.addf %244, %245 : vector<8x96xf32>
    %247 = vector.extract_strided_slice %246 {offsets = [0, 0], sizes = [8, 32], strides = [1, 1]} : vector<8x96xf32> to vector<8x32xf32>
    %248 = vector.extract_strided_slice %246 {offsets = [0, 32], sizes = [8, 32], strides = [1, 1]} : vector<8x96xf32> to vector<8x32xf32>
    %249 = vector.extract_strided_slice %246 {offsets = [0, 64], sizes = [8, 32], strides = [1, 1]} : vector<8x96xf32> to vector<8x32xf32>
    %250 = vector.extract_strided_slice %241 {offsets = [0, 96], sizes = [8, 32], strides = [1, 1]} : vector<8x128xf32> to vector<8x32xf32>
    %251 = arith.mulf %248, %216 : vector<8x32xf32>
    %252 = arith.mulf %247, %250 : vector<8x32xf32>
    %253 = arith.addf %251, %252 : vector<8x32xf32>
    %254 = math.tanh %253 : vector<8x32xf32>
    %255 = arith.mulf %249, %254 : vector<8x32xf32>
    %cst_62 = arith.constant dense<0.000000e+00> : vector<8x128xf32>
    %256 = tpu.matmul %255, %1, %cst_62 {dimension_numbers = #tpu.dot_dimension_numbers<[1], [0], [0], [1], [0, 0, 1, 1], [], []>} : vector<8x32xf32>, vector<32x128xf32>, vector<8x128xf32> -> vector<8x128xf32>
    %257 = arith.addf %256, %7 : vector<8x128xf32>
    %cst_63 = arith.constant dense<0.000000e+00> : vector<8x128xf32>
    %258 = tpu.matmul %237, %3, %cst_63 {dimension_numbers = #tpu.dot_dimension_numbers<[1], [0], [0], [1], [0, 0, 1, 1], [], []>} : vector<8x32xf32>, vector<32x128xf32>, vector<8x128xf32> -> vector<8x128xf32>
    %259 = arith.addf %257, %258 : vector<8x128xf32>
    %260 = math.tanh %259 : vector<8x128xf32>
    %261 = vector.extract_strided_slice %260 {offsets = [0, 0], sizes = [8, 96], strides = [1, 1]} : vector<8x128xf32> to vector<8x96xf32>
    %cst_64 = arith.constant 5.000000e-01 : f32
    %262 = vector.broadcast %cst_64 : f32 to vector<8x96xf32>
    %263 = arith.mulf %262, %261 : vector<8x96xf32>
    %cst_65 = arith.constant 5.000000e-01 : f32
    %264 = vector.broadcast %cst_65 : f32 to vector<8x96xf32>
    %265 = arith.addf %263, %264 : vector<8x96xf32>
    %266 = vector.extract_strided_slice %265 {offsets = [0, 0], sizes = [8, 32], strides = [1, 1]} : vector<8x96xf32> to vector<8x32xf32>
    %267 = vector.extract_strided_slice %265 {offsets = [0, 32], sizes = [8, 32], strides = [1, 1]} : vector<8x96xf32> to vector<8x32xf32>
    %268 = vector.extract_strided_slice %265 {offsets = [0, 64], sizes = [8, 32], strides = [1, 1]} : vector<8x96xf32> to vector<8x32xf32>
    %269 = vector.extract_strided_slice %260 {offsets = [0, 96], sizes = [8, 32], strides = [1, 1]} : vector<8x128xf32> to vector<8x32xf32>
    %270 = arith.mulf %267, %235 : vector<8x32xf32>
    %271 = arith.mulf %266, %269 : vector<8x32xf32>
    %272 = arith.addf %270, %271 : vector<8x32xf32>
    %273 = math.tanh %272 : vector<8x32xf32>
    %274 = arith.mulf %268, %273 : vector<8x32xf32>
    %275 = vector.extract_strided_slice %11 {offsets = [56, 0], sizes = [8, 128], strides = [1, 1]} : vector<64x128xf32> to vector<8x128xf32>
    %cst_66 = arith.constant dense<0.000000e+00> : vector<8x128xf32>
    %276 = tpu.matmul %255, %2, %cst_66 {dimension_numbers = #tpu.dot_dimension_numbers<[1], [0], [0], [1], [0, 0, 1, 1], [], []>} : vector<8x32xf32>, vector<32x128xf32>, vector<8x128xf32> -> vector<8x128xf32>
    %277 = arith.addf %275, %276 : vector<8x128xf32>
    %278 = math.tanh %277 : vector<8x128xf32>
    %279 = vector.extract_strided_slice %278 {offsets = [0, 0], sizes = [8, 96], strides = [1, 1]} : vector<8x128xf32> to vector<8x96xf32>
    %cst_67 = arith.constant 5.000000e-01 : f32
    %280 = vector.broadcast %cst_67 : f32 to vector<8x96xf32>
    %281 = arith.mulf %280, %279 : vector<8x96xf32>
    %cst_68 = arith.constant 5.000000e-01 : f32
    %282 = vector.broadcast %cst_68 : f32 to vector<8x96xf32>
    %283 = arith.addf %281, %282 : vector<8x96xf32>
    %284 = vector.extract_strided_slice %283 {offsets = [0, 0], sizes = [8, 32], strides = [1, 1]} : vector<8x96xf32> to vector<8x32xf32>
    %285 = vector.extract_strided_slice %283 {offsets = [0, 32], sizes = [8, 32], strides = [1, 1]} : vector<8x96xf32> to vector<8x32xf32>
    %286 = vector.extract_strided_slice %283 {offsets = [0, 64], sizes = [8, 32], strides = [1, 1]} : vector<8x96xf32> to vector<8x32xf32>
    %287 = vector.extract_strided_slice %278 {offsets = [0, 96], sizes = [8, 32], strides = [1, 1]} : vector<8x128xf32> to vector<8x32xf32>
    %288 = arith.mulf %285, %253 : vector<8x32xf32>
    %289 = arith.mulf %284, %287 : vector<8x32xf32>
    %290 = arith.addf %288, %289 : vector<8x32xf32>
    %291 = math.tanh %290 : vector<8x32xf32>
    %292 = arith.mulf %286, %291 : vector<8x32xf32>
    %cst_69 = arith.constant dense<0.000000e+00> : vector<8x128xf32>
    %293 = tpu.matmul %292, %1, %cst_69 {dimension_numbers = #tpu.dot_dimension_numbers<[1], [0], [0], [1], [0, 0, 1, 1], [], []>} : vector<8x32xf32>, vector<32x128xf32>, vector<8x128xf32> -> vector<8x128xf32>
    %294 = arith.addf %293, %7 : vector<8x128xf32>
    %cst_70 = arith.constant dense<0.000000e+00> : vector<8x128xf32>
    %295 = tpu.matmul %274, %3, %cst_70 {dimension_numbers = #tpu.dot_dimension_numbers<[1], [0], [0], [1], [0, 0, 1, 1], [], []>} : vector<8x32xf32>, vector<32x128xf32>, vector<8x128xf32> -> vector<8x128xf32>
    %296 = arith.addf %294, %295 : vector<8x128xf32>
    %297 = math.tanh %296 : vector<8x128xf32>
    %298 = vector.extract_strided_slice %297 {offsets = [0, 0], sizes = [8, 96], strides = [1, 1]} : vector<8x128xf32> to vector<8x96xf32>
    %cst_71 = arith.constant 5.000000e-01 : f32
    %299 = vector.broadcast %cst_71 : f32 to vector<8x96xf32>
    %300 = arith.mulf %299, %298 : vector<8x96xf32>
    %cst_72 = arith.constant 5.000000e-01 : f32
    %301 = vector.broadcast %cst_72 : f32 to vector<8x96xf32>
    %302 = arith.addf %300, %301 : vector<8x96xf32>
    %303 = vector.extract_strided_slice %302 {offsets = [0, 0], sizes = [8, 32], strides = [1, 1]} : vector<8x96xf32> to vector<8x32xf32>
    %304 = vector.extract_strided_slice %302 {offsets = [0, 32], sizes = [8, 32], strides = [1, 1]} : vector<8x96xf32> to vector<8x32xf32>
    %305 = vector.extract_strided_slice %302 {offsets = [0, 64], sizes = [8, 32], strides = [1, 1]} : vector<8x96xf32> to vector<8x32xf32>
    %306 = vector.extract_strided_slice %297 {offsets = [0, 96], sizes = [8, 32], strides = [1, 1]} : vector<8x128xf32> to vector<8x32xf32>
    %307 = arith.mulf %304, %272 : vector<8x32xf32>
    %308 = arith.mulf %303, %306 : vector<8x32xf32>
    %309 = arith.addf %307, %308 : vector<8x32xf32>
    %310 = math.tanh %309 : vector<8x32xf32>
    %311 = arith.mulf %305, %310 : vector<8x32xf32>
    %c0_73 = arith.constant 0 : index
    %c0_74 = arith.constant 0 : index
    %312 = vector.load %arg7[%c0_73, %c0_74] : memref<32x32xf32, #tpu.memory_space<vmem>>, vector<32x32xf32>
    %cst_75 = arith.constant dense<0.000000e+00> : vector<8x32xf32>
    %313 = tpu.matmul %311, %312, %cst_75 {dimension_numbers = #tpu.dot_dimension_numbers<[1], [0], [0], [1], [0, 0, 1, 1], [], []>} : vector<8x32xf32>, vector<32x32xf32>, vector<8x32xf32> -> vector<8x32xf32>
    %c0_76 = arith.constant 0 : index
    %c0_77 = arith.constant 0 : index
    %314 = vector.load %arg8[%c0_76, %c0_77] : memref<1x32xf32, #tpu.memory_space<vmem>>, vector<1x32xf32>
    %315 = vector.broadcast %314 : vector<1x32xf32> to vector<8x32xf32>
    %316 = arith.addf %313, %315 : vector<8x32xf32>
    %cst_78 = arith.constant 0.000000e+00 : f32
    %317 = vector.broadcast %cst_78 : f32 to vector<8x32xf32>
    %318 = arith.maximumf %316, %317 : vector<8x32xf32>
    %c0_79 = arith.constant 0 : index
    %c0_80 = arith.constant 0 : index
    %319 = vector.load %arg9[%c0_79, %c0_80] : memref<1x32xf32, #tpu.memory_space<vmem>>, vector<1x32xf32>
    %320 = vector.broadcast %319 : vector<1x32xf32> to vector<8x32xf32>
    %321 = arith.mulf %318, %320 : vector<8x32xf32>
    %cst_81 = arith.constant dense<0.000000e+00> : vector<8xf32>
    %322 = vector.multi_reduction <add>, %321, %cst_81 [1] : vector<8x32xf32> to vector<8xf32>
    %323 = vector.shape_cast %322 : vector<8xf32> to vector<8x1xf32>
    %c0_82 = arith.constant 0 : index
    %c0_83 = arith.constant 0 : index
    %324 = vector.load %arg10[%c0_82, %c0_83] : memref<1x1xf32, #tpu.memory_space<vmem>>, vector<1x1xf32>
    %325 = vector.broadcast %324 : vector<1x1xf32> to vector<8x1xf32>
    %326 = arith.addf %323, %325 : vector<8x1xf32>
    %c0_84 = arith.constant 0 : index
    %c0_85 = arith.constant 0 : index
    %327 = vector.load %arg11[%c0_84, %c0_85] : memref<8x1xf32, #tpu.memory_space<vmem>>, vector<8x1xf32>
    tpu.vector_store %arg11[%c0_84, %c0_85], %326 {strides = array<i32>} : memref<8x1xf32, #tpu.memory_space<vmem>>, vector<8x1xf32>,
    return
  }
}

</mosaic_0001>

<llo_original>
// kernel: tpu_custom_call.1
$region0: #{tpu_custom_call.1}
  #allocation0 [shape = 'u32[]', space=smem, size = 0x4, offset = 0x4, fixed_abs, tag = 'smem constant byte address 0x4 - core index']
  #allocation1 [shape = 'u32[72,128]{1,0:T(1,128)}', space=vmem, size = 0x9000, scoped, tag = 'internal scratch']
  #allocation2 [shape = 'f32[1,1]{1,0:T(1,128)S(1)}', space=vmem, size = 0x200, scoped, tag = 'scoped memory for tpu_custom_call.1']
  %s0 = inlined_call_operand.vmem [shape: f32[64,8], index: 0, kind: input, shape index: {}]
  %s1 = inlined_call_operand.vmem [shape: f32[8,128], index: 1, kind: input, shape index: {}]
  %s2 = inlined_call_operand.vmem [shape: f32[32,128], index: 2, kind: input, shape index: {}]
  %s3 = inlined_call_operand.vmem [shape: f32[1,128], index: 3, kind: input, shape index: {}]
  %s4 = inlined_call_operand.vmem [shape: f32[32,128], index: 4, kind: input, shape index: {}]
  %s5 = inlined_call_operand.hbm [shape: f32[32,128], index: 5, kind: input, shape index: {}]
  %s6 = inlined_call_operand.vmem [shape: f32[1,128], index: 6, kind: input, shape index: {}]
  %s7 = inlined_call_operand.hbm [shape: f32[32,32], index: 7, kind: input, shape index: {}]
  %s8 = inlined_call_operand.vmem [shape: f32[1,32], index: 8, kind: input, shape index: {}]
  %s9 = inlined_call_operand.vmem [shape: f32[1,32], index: 9, kind: input, shape index: {}]
  %s10 = inlined_call_operand.<no memory space> [shape: f32[1,1], index: 10, kind: input, shape index: {}]
  %s11 = inlined_call_operand.vmem [shape: f32[8,1], index: 11, kind: output, shape index: {}]
  %s12 = sld [smem:[#allocation0]]
  $region62: #{tpu_custom_call.1} parent=0
    _
  %s14 = ssub.s32 1, %s12
  %s15 = scalar_select 0, %s14, %s12
  %v16 = vstv %s10
  %17 = vst [vmem:[#allocation2] sm:$0x1] %v16
  $region1: #{tpu_custom_call.1} parent=0
    #allocation3 [shape = 'u8[16384]{0}', space=vmem, size = 0x4000, scoped, tag = 'input window, operand 5, single buffered']
    #allocation4 [shape = 's32[1]{0}', space=sflag, size = 0x4, scoped, tag = 'scoped memory for tpu_custom_call.1']
    #allocation5 [shape = 'u8[16384]{0}', space=vmem, size = 0x4000, scoped, tag = 'input window, operand 7, single buffered']
    #allocation6 [shape = 's32[1]{0}', space=sflag, size = 0x4, scoped, tag = 'scoped memory for tpu_custom_call.1']
    %18 = vsyncpa [#allocation4], 0
    %19 = vsyncpa [#allocation6], 0
    // Predicated region
    $region2: #{tpu_custom_call.1} parent=1 // pred_check
      _
    $region3: #{tpu_custom_call.1} parent=1 // pred_check_branch
      %21 = sbr.rel (0) target = $region5
    $region4: #{tpu_custom_call.1} parent=1 // pred_region
      _
    $region5: #{tpu_custom_call.1} parent=1 // pred_fallthru
      _
    // Predicated region
    $region6: #{tpu_custom_call.1} parent=1 // pred_check
      _
    $region7: #{tpu_custom_call.1} parent=1 // pred_check_branch
      %23 = sbr.rel (0) target = $region9
    $region8: #{tpu_custom_call.1} parent=1 // pred_region
      _
    $region9: #{tpu_custom_call.1} parent=1 // pred_fallthru
      _
    // Predicated region
    $region10: #{tpu_custom_call.1} parent=1 // pred_check
      _
    $region11: #{tpu_custom_call.1} parent=1 // pred_check_branch
      %25 = sbr.rel (0) target = $region13
    $region12: #{tpu_custom_call.1} parent=1 // pred_region
      _
    $region13: #{tpu_custom_call.1} parent=1 // pred_fallthru
      _
    // Predicated region
    $region14: #{tpu_custom_call.1} parent=1 // pred_check
      _
    $region15: #{tpu_custom_call.1} parent=1 // pred_check_branch
      %27 = sbr.rel (0) target = $region17
    $region16: #{tpu_custom_call.1} parent=1 // pred_region
      _
    $region17: #{tpu_custom_call.1} parent=1 // pred_fallthru
      _
    // Predicated region
    $region18: #{tpu_custom_call.1} parent=1 // pred_check
      _
    $region19: #{tpu_custom_call.1} parent=1 // pred_check_branch
      %29 = sbr.rel (0) target = $region21
    $region20: #{tpu_custom_call.1} parent=1 // pred_region
      _
    $region21: #{tpu_custom_call.1} parent=1 // pred_fallthru
      _
    // Predicated region
    $region22: #{tpu_custom_call.1} parent=1 // pred_check
      _
    $region23: #{tpu_custom_call.1} parent=1 // pred_check_branch
      %31 = sbr.rel (0) target = $region25
    $region24: #{tpu_custom_call.1} parent=1 // pred_region
      %33 = vsyncadd [#allocation4], 0
      %s34 = sshll.u32 %s5, 4
      %s35 = int_to_ptr.hbm [resolvable:$true] %s34
      %s36 = sshll.u32 [#allocation3], 4
      %s37 = int_to_ptr.vmem [resolvable:$true] %s36
      %42 = dma.hbm_to_vmem [thread:$0]  %s35, 512, %s37, [#allocation4], 128, 128, 8
    $region25: #{tpu_custom_call.1} parent=1 // pred_fallthru
      _
    // Predicated region
    $region26: #{tpu_custom_call.1} parent=1 // pred_check
      _
    $region27: #{tpu_custom_call.1} parent=1 // pred_check_branch
      %44 = sbr.rel (0) target = $region29
    $region28: #{tpu_custom_call.1} parent=1 // pred_region
      _
    $region29: #{tpu_custom_call.1} parent=1 // pred_fallthru
      _
    // Predicated region
    $region30: #{tpu_custom_call.1} parent=1 // pred_check
      _
    $region31: #{tpu_custom_call.1} parent=1 // pred_check_branch
      %46 = sbr.rel (0) target = $region33
    $region32: #{tpu_custom_call.1} parent=1 // pred_region
      %48 = vsyncadd [#allocation6], 0
      %s49 = sshll.u32 %s7, 4
      %s50 = int_to_ptr.hbm [resolvable:$true] %s49
      %s51 = sshll.u32 [#allocation5], 4
      %s52 = int_to_ptr.vmem [resolvable:$true] %s51
      %57 = dma.hbm_to_vmem [thread:$0]  %s50, 512, %s52, [#allocation6], 128, 128, 8
    $region33: #{tpu_custom_call.1} parent=1 // pred_fallthru
      _
    // Predicated region
    $region34: #{tpu_custom_call.1} parent=1 // pred_check
      _
    $region35: #{tpu_custom_call.1} parent=1 // pred_check_branch
      %59 = sbr.rel (0) target = $region37
    $region36: #{tpu_custom_call.1} parent=1 // pred_region
      _
    $region37: #{tpu_custom_call.1} parent=1 // pred_fallthru
      _
    // Predicated region
    $region38: #{tpu_custom_call.1} parent=1 // pred_check
      _
    $region39: #{tpu_custom_call.1} parent=1 // pred_check_branch
      %61 = sbr.rel (0) target = $region41
    $region40: #{tpu_custom_call.1} parent=1 // pred_region
      _
    $region41: #{tpu_custom_call.1} parent=1 // pred_fallthru
      _
    // Predicated region
    $region42: #{tpu_custom_call.1} parent=1 // pred_check
      _
    $region43: #{tpu_custom_call.1} parent=1 // pred_check_branch
      %63 = sbr.rel (0) target = $region45
    $region44: #{tpu_custom_call.1} parent=1 // pred_region
      _
    $region45: #{tpu_custom_call.1} parent=1 // pred_fallthru
      _
    // Predicated region
    $region46: #{tpu_custom_call.1} parent=1 // pred_check
      _
    $region47: #{tpu_custom_call.1} parent=1 // pred_check_branch
      %65 = sbr.rel (0) target = $region49
    $region48: #{tpu_custom_call.1} parent=1 // pred_region
      %67 = dma.done [#allocation4], 512
    $region49: #{tpu_custom_call.1} parent=1 // pred_fallthru
      _
    // Predicated region
    $region50: #{tpu_custom_call.1} parent=1 // pred_check
      _
    $region51: #{tpu_custom_call.1} parent=1 // pred_check_branch
      %69 = sbr.rel (0) target = $region53
    $region52: #{tpu_custom_call.1} parent=1 // pred_region
      %71 = dma.done [#allocation6], 512
    $region53: #{tpu_custom_call.1} parent=1 // pred_fallthru
      _
    %v72 = vld [vmem:[%s1] sm:$0xff]
    %v73 = vld [vmem:[%s4] sm:$0xff]
    %v74 = vld [vmem:[%s4 + $0x8] sm:$0xff]
    %v75 = vld [vmem:[%s4 + $0x10] sm:$0xff]
    %v76 = vld [vmem:[%s4 + $0x18] sm:$0xff]
    %v77 = vld [vmem:[%s2] sm:$0xff]
    %v78 = vld [vmem:[%s2 + $0x8] sm:$0xff]
    %v79 = vld [vmem:[%s2 + $0x10] sm:$0xff]
    %v80 = vld [vmem:[%s2 + $0x18] sm:$0xff]
    %v81 = vld [vmem:[#allocation3] sm:$0xff]
    %v82 = vld [vmem:[#allocation3 + $0x8] sm:$0xff]
    %v83 = vld [vmem:[#allocation3 + $0x10] sm:$0xff]
    %v84 = vld [vmem:[#allocation3 + $0x18] sm:$0xff]
    %v85 = vld [vmem:[%s3] sm:$0x1]
    %v86 = vld [vmem:[%s6] sm:$0x1]
    %v88 = vperm.slane %v86, 0
    %v90 = vld [vmem:[%s0] sm:$0xff]
    %v91 = vld [vmem:[%s0 + $0x8] sm:$0xff]
    %v92 = vld [vmem:[%s0 + $0x10] sm:$0xff]
    %v93 = vld [vmem:[%s0 + $0x18] sm:$0xff]
    %v94 = vld [vmem:[%s0 + $0x20] sm:$0xff]
    %v95 = vld [vmem:[%s0 + $0x28] sm:$0xff]
    %v96 = vld [vmem:[%s0 + $0x30] sm:$0xff]
    %v97 = vld [vmem:[%s0 + $0x38] sm:$0xff]
    %v99 = vperm.slane %v85, 0
    %vm101 = vcmask 64512
    %v103 = vsel %vm101, %v90, 0
    %v106 = vsel %vm101, %v91, 0
    %v109 = vsel %vm101, %v92, 0
    %v112 = vsel %vm101, %v93, 0
    %v115 = vsel %vm101, %v94, 0
    %v118 = vsel %vm101, %v95, 0
    %v121 = vsel %vm101, %v96, 0
    %v124 = vsel %vm101, %v97, 0
    %126 = vmatpush.msra.mxu0 0.0
    %127 = vmatpush.msra.mxu0 0.0
    %128 = vmatpush.msra.mxu0 0.0
    %129 = vmatpush.msra.mxu0 0.0
    %130 = vmatpush.msra.mxu0 0.0
    %131 = vmatpush.msra.mxu0 0.0
    %132 = vmatpush.msra.mxu0 0.0
    %133 = vmatpush.msra.mxu0 0.0
    %134 = vmatpush.msra.mxu0 0.0
    %135 = vmatpush.msra.mxu0 0.0
    %136 = vmatpush.msra.mxu0 0.0
    %137 = vmatpush.msra.mxu0 0.0
    %138 = vmatpush.msra.mxu0 0.0
    %139 = vmatpush.msra.mxu0 0.0
    %140 = vmatpush.msra.mxu0 0.0
    %141 = vmatpush.msra.mxu0 %v72
    %142 = vmatmul.f32.gmra.mxu0 %v103
    %v143 = vpop.f32.mrf.mxu0
    %v144 = vadd.f32 %v99, %v143
    %145 = vmatmul.f32.gmra.mxu0 %v106
    %v146 = vpop.f32.mrf.mxu0
    %v147 = vadd.f32 %v99, %v146
    %148 = vmatmul.f32.gmra.mxu0 %v109
    %v149 = vpop.f32.mrf.mxu0
    %v150 = vadd.f32 %v99, %v149
    %151 = vmatmul.f32.gmra.mxu0 %v112
    %v152 = vpop.f32.mrf.mxu0
    %v153 = vadd.f32 %v99, %v152
    %154 = vmatmul.f32.gmra.mxu0 %v115
    %v155 = vpop.f32.mrf.mxu0
    %v156 = vadd.f32 %v99, %v155
    %157 = vmatmul.f32.gmra.mxu0 %v118
    %v158 = vpop.f32.mrf.mxu0
    %v159 = vadd.f32 %v99, %v158
    %160 = vmatmul.f32.gmra.mxu0 %v121
    %v161 = vpop.f32.mrf.mxu0
    %v162 = vadd.f32 %v99, %v161
    %163 = vmatmul.f32.gmra.mxu0 %v124
    %v164 = vpop.f32.mrf.mxu0
    %v165 = vadd.f32 %v99, %v164
    %166 = vdwg.mxu0
    %vm167 = vcmask 261120
    %v169 = vsel %vm167, 0.0, 0
    %171 = vmatpush.msra.mxu0 0.0
    %172 = vmatpush.msra.mxu0 0.0
    %173 = vmatpush.msra.mxu0 0.0
    %174 = vmatpush.msra.mxu0 0.0
    %175 = vmatpush.msra.mxu0 0.0
    %176 = vmatpush.msra.mxu0 0.0
    %177 = vmatpush.msra.mxu0 0.0
    %178 = vmatpush.msra.mxu0 0.0
    %179 = vmatpush.msra.mxu0 0.0
    %180 = vmatpush.msra.mxu0 0.0
    %181 = vmatpush.msra.mxu0 0.0
    %182 = vmatpush.msra.mxu0 0.0
    %183 = vmatpush.msra.mxu0 %v80
    %184 = vmatpush.msra.mxu0 %v79
    %185 = vmatpush.msra.mxu0 %v78
    %186 = vmatpush.msra.mxu0 %v77
    %187 = vmatmul.f32.gmra.mxu0 %v169
    %v188 = vpop.f32.mrf.mxu0
    %v189 = vadd.f32 0.0, %v188
    %190 = vdwg.mxu0
    %v191 = vadd.f32 %v144, %v189
    %v192 = vtanh.pop %v191
    %v193 = vmul.f32 %v192, 0.5
    %v194 = vadd.f32 %v193, 0.5
    %v195 = vmul.f32 %v194, 0.0
    %197 = vrot.lane.b32.xlu0 %v192, 32
    %v198 = vpop.permute.xlu0 %197
    %v200 = vmul.f32 %v194, %v198
    %202 = vrot.lane.b32.xlu0 %v200, 32
    %v203 = vpop.permute.xlu0 %202
    %v205 = vadd.f32 %v195, %v203
    %v206 = vtanh.pop %v205
    %208 = vrot.lane.b32.xlu0 %v206, 32
    %v209 = vpop.permute.xlu0 %208
    %v211 = vmul.f32 %v194, %v209
    %213 = vrot.lane.b32.xlu0 %v211, 64
    %v214 = vpop.permute.xlu0 %213
    %v215 = vsel %vm167, %v214, 0
    %217 = vmatpush.msra.mxu0 0.0
    %218 = vmatpush.msra.mxu0 0.0
    %219 = vmatpush.msra.mxu0 0.0
    %220 = vmatpush.msra.mxu0 0.0
    %221 = vmatpush.msra.mxu0 0.0
    %222 = vmatpush.msra.mxu0 0.0
    %223 = vmatpush.msra.mxu0 0.0
    %224 = vmatpush.msra.mxu0 0.0
    %225 = vmatpush.msra.mxu0 0.0
    %226 = vmatpush.msra.mxu0 0.0
    %227 = vmatpush.msra.mxu0 0.0
    %228 = vmatpush.msra.mxu0 0.0
    %229 = vmatpush.msra.mxu0 %v76
    %230 = vmatpush.msra.mxu0 %v75
    %231 = vmatpush.msra.mxu0 %v74
    %232 = vmatpush.msra.mxu0 %v73
    %233 = vmatmul.f32.gmra.mxu0 %v215
    %v234 = vpop.f32.mrf.mxu0
    %v235 = vadd.f32 %v88, %v234
    %236 = vdwg.mxu0
    %237 = vmatpush.msra.mxu0 0.0
    %238 = vmatpush.msra.mxu0 0.0
    %239 = vmatpush.msra.mxu0 0.0
    %240 = vmatpush.msra.mxu0 0.0
    %241 = vmatpush.msra.mxu0 0.0
    %242 = vmatpush.msra.mxu0 0.0
    %243 = vmatpush.msra.mxu0 0.0
    %244 = vmatpush.msra.mxu0 0.0
    %245 = vmatpush.msra.mxu0 0.0
    %246 = vmatpush.msra.mxu0 0.0
    %247 = vmatpush.msra.mxu0 0.0
    %248 = vmatpush.msra.mxu0 0.0
    %249 = vmatpush.msra.mxu0 %v84
    %250 = vmatpush.msra.mxu0 %v83
    %251 = vmatpush.msra.mxu0 %v82
    %252 = vmatpush.msra.mxu0 %v81
    %253 = vmatmul.f32.gmra.mxu0 %v169
    %v254 = vpop.f32.mrf.mxu0
    %v255 = vadd.f32 0.0, %v254
    %256 = vdwg.mxu0
    %v257 = vadd.f32 %v235, %v255
    %v258 = vtanh.pop %v257
    %v259 = vmul.f32 %v258, 0.5
    %v260 = vadd.f32 %v259, 0.5
    %v261 = vmul.f32 %v260, 0.0
    %263 = vrot.lane.b32.xlu0 %v258, 32
    %v264 = vpop.permute.xlu0 %263
    %v266 = vmul.f32 %v260, %v264
    %268 = vrot.lane.b32.xlu0 %v266, 32
    %v269 = vpop.permute.xlu0 %268
    %v271 = vadd.f32 %v261, %v269
    %v272 = vtanh.pop %v271
    %274 = vrot.lane.b32.xlu0 %v272, 32
    %v275 = vpop.permute.xlu0 %274
    %v277 = vmul.f32 %v260, %v275
    %278 = vmatpush.msra.mxu0 0.0
    %279 = vmatpush.msra.mxu0 0.0
    %280 = vmatpush.msra.mxu0 0.0
    %281 = vmatpush.msra.mxu0 0.0
    %282 = vmatpush.msra.mxu0 0.0
    %283 = vmatpush.msra.mxu0 0.0
    %284 = vmatpush.msra.mxu0 0.0
    %285 = vmatpush.msra.mxu0 0.0
    %286 = vmatpush.msra.mxu0 0.0
    %287 = vmatpush.msra.mxu0 0.0
    %288 = vmatpush.msra.mxu0 0.0
    %289 = vmatpush.msra.mxu0 0.0
    %290 = vmatpush.msra.mxu0 %v80
    %291 = vmatpush.msra.mxu0 %v79
    %292 = vmatpush.msra.mxu0 %v78
    %293 = vmatpush.msra.mxu0 %v77
    %294 = vmatmul.f32.gmra.mxu0 %v215
    %v295 = vpop.f32.mrf.mxu0
    %v296 = vadd.f32 0.0, %v295
    %297 = vdwg.mxu0
    %v298 = vadd.f32 %v147, %v296
    %v299 = vtanh.pop %v298
    %v300 = vmul.f32 %v299, 0.5
    %v301 = vadd.f32 %v300, 0.5
    %v302 = vmul.f32 %v301, %v205
    %304 = vrot.lane.b32.xlu0 %v299, 32
    %v305 = vpop.permute.xlu0 %304
    %v307 = vmul.f32 %v301, %v305
    %309 = vrot.lane.b32.xlu0 %v307, 32
    %v310 = vpop.permute.xlu0 %309
    %v312 = vadd.f32 %v302, %v310
    %v313 = vtanh.pop %v312
    %315 = vrot.lane.b32.xlu0 %v313, 32
    %v316 = vpop.permute.xlu0 %315
    %v318 = vmul.f32 %v301, %v316
    %320 = vrot.lane.b32.xlu0 %v318, 64
    %v321 = vpop.permute.xlu0 %320
    %v322 = vsel %vm167, %v321, 0
    %324 = vmatpush.msra.mxu0 0.0
    %325 = vmatpush.msra.mxu0 0.0
    %326 = vmatpush.msra.mxu0 0.0
    %327 = vmatpush.msra.mxu0 0.0
    %328 = vmatpush.msra.mxu0 0.0
    %329 = vmatpush.msra.mxu0 0.0
    %330 = vmatpush.msra.mxu0 0.0
    %331 = vmatpush.msra.mxu0 0.0
    %332 = vmatpush.msra.mxu0 0.0
    %333 = vmatpush.msra.mxu0 0.0
    %334 = vmatpush.msra.mxu0 0.0
    %335 = vmatpush.msra.mxu0 0.0
    %336 = vmatpush.msra.mxu0 %v76
    %337 = vmatpush.msra.mxu0 %v75
    %338 = vmatpush.msra.mxu0 %v74
    %339 = vmatpush.msra.mxu0 %v73
    %340 = vmatmul.f32.gmra.mxu0 %v322
    %v341 = vpop.f32.mrf.mxu0
    %v342 = vadd.f32 %v88, %v341
    %343 = vdwg.mxu0
    %345 = vrot.lane.b32.xlu0 %v277, 64
    %v346 = vpop.permute.xlu0 %345
    %v347 = vsel %vm167, %v346, 0
    %349 = vmatpush.msra.mxu0 0.0
    %350 = vmatpush.msra.mxu0 0.0
    %351 = vmatpush.msra.mxu0 0.0
    %352 = vmatpush.msra.mxu0 0.0
    %353 = vmatpush.msra.mxu0 0.0
    %354 = vmatpush.msra.mxu0 0.0
    %355 = vmatpush.msra.mxu0 0.0
    %356 = vmatpush.msra.mxu0 0.0
    %357 = vmatpush.msra.mxu0 0.0
    %358 = vmatpush.msra.mxu0 0.0
    %359 = vmatpush.msra.mxu0 0.0
    %360 = vmatpush.msra.mxu0 0.0
    %361 = vmatpush.msra.mxu0 %v84
    %362 = vmatpush.msra.mxu0 %v83
    %363 = vmatpush.msra.mxu0 %v82
    %364 = vmatpush.msra.mxu0 %v81
    %365 = vmatmul.f32.gmra.mxu0 %v347
    %v366 = vpop.f32.mrf.mxu0
    %v367 = vadd.f32 0.0, %v366
    %368 = vdwg.mxu0
    %v369 = vadd.f32 %v342, %v367
    %v370 = vtanh.pop %v369
    %v371 = vmul.f32 %v370, 0.5
    %v372 = vadd.f32 %v371, 0.5
    %v373 = vmul.f32 %v372, %v271
    %375 = vrot.lane.b32.xlu0 %v370, 32
    %v376 = vpop.permute.xlu0 %375
    %v378 = vmul.f32 %v372, %v376
    %380 = vrot.lane.b32.xlu0 %v378, 32
    %v381 = vpop.permute.xlu0 %380
    %v383 = vadd.f32 %v373, %v381
    %v384 = vtanh.pop %v383
    %386 = vrot.lane.b32.xlu0 %v384, 32
    %v387 = vpop.permute.xlu0 %386
    %v389 = vmul.f32 %v372, %v387
    %390 = vmatpush.msra.mxu0 0.0
    %391 = vmatpush.msra.mxu0 0.0
    %392 = vmatpush.msra.mxu0 0.0
    %393 = vmatpush.msra.mxu0 0.0
    %394 = vmatpush.msra.mxu0 0.0
    %395 = vmatpush.msra.mxu0 0.0
    %396 = vmatpush.msra.mxu0 0.0
    %397 = vmatpush.msra.mxu0 0.0
    %398 = vmatpush.msra.mxu0 0.0
    %399 = vmatpush.msra.mxu0 0.0
    %400 = vmatpush.msra.mxu0 0.0
    %401 = vmatpush.msra.mxu0 0.0
    %402 = vmatpush.msra.mxu0 %v80
    %403 = vmatpush.msra.mxu0 %v79
    %404 = vmatpush.msra.mxu0 %v78
    %405 = vmatpush.msra.mxu0 %v77
    %406 = vmatmul.f32.gmra.mxu0 %v322
    %v407 = vpop.f32.mrf.mxu0
    %v408 = vadd.f32 0.0, %v407
    %409 = vdwg.mxu0
    %v410 = vadd.f32 %v150, %v408
    %v411 = vtanh.pop %v410
    %v412 = vmul.f32 %v411, 0.5
    %v413 = vadd.f32 %v412, 0.5
    %v414 = vmul.f32 %v413, %v312
    %416 = vrot.lane.b32.xlu0 %v411, 32
    %v417 = vpop.permute.xlu0 %416
    %v419 = vmul.f32 %v413, %v417
    %421 = vrot.lane.b32.xlu0 %v419, 32
    %v422 = vpop.permute.xlu0 %421
    %v424 = vadd.f32 %v414, %v422
    %v425 = vtanh.pop %v424
    %427 = vrot.lane.b32.xlu0 %v425, 32
    %v428 = vpop.permute.xlu0 %427
    %v430 = vmul.f32 %v413, %v428
    %432 = vrot.lane.b32.xlu0 %v430, 64
    %v433 = vpop.permute.xlu0 %432
    %v434 = vsel %vm167, %v433, 0
    %436 = vmatpush.msra.mxu0 0.0
    %437 = vmatpush.msra.mxu0 0.0
    %438 = vmatpush.msra.mxu0 0.0
    %439 = vmatpush.msra.mxu0 0.0
    %440 = vmatpush.msra.mxu0 0.0
    %441 = vmatpush.msra.mxu0 0.0
    %442 = vmatpush.msra.mxu0 0.0
    %443 = vmatpush.msra.mxu0 0.0
    %444 = vmatpush.msra.mxu0 0.0
    %445 = vmatpush.msra.mxu0 0.0
    %446 = vmatpush.msra.mxu0 0.0
    %447 = vmatpush.msra.mxu0 0.0
    %448 = vmatpush.msra.mxu0 %v76
    %449 = vmatpush.msra.mxu0 %v75
    %450 = vmatpush.msra.mxu0 %v74
    %451 = vmatpush.msra.mxu0 %v73
    %452 = vmatmul.f32.gmra.mxu0 %v434
    %v453 = vpop.f32.mrf.mxu0
    %v454 = vadd.f32 %v88, %v453
    %455 = vdwg.mxu0
    %457 = vrot.lane.b32.xlu0 %v389, 64
    %v458 = vpop.permute.xlu0 %457
    %v459 = vsel %vm167, %v458, 0
    %461 = vmatpush.msra.mxu0 0.0
    %462 = vmatpush.msra.mxu0 0.0
    %463 = vmatpush.msra.mxu0 0.0
    %464 = vmatpush.msra.mxu0 0.0
    %465 = vmatpush.msra.mxu0 0.0
    %466 = vmatpush.msra.mxu0 0.0
    %467 = vmatpush.msra.mxu0 0.0
    %468 = vmatpush.msra.mxu0 0.0
    %469 = vmatpush.msra.mxu0 0.0
    %470 = vmatpush.msra.mxu0 0.0
    %471 = vmatpush.msra.mxu0 0.0
    %472 = vmatpush.msra.mxu0 0.0
    %473 = vmatpush.msra.mxu0 %v84
    %474 = vmatpush.msra.mxu0 %v83
    %475 = vmatpush.msra.mxu0 %v82
    %476 = vmatpush.msra.mxu0 %v81
    %477 = vmatmul.f32.gmra.mxu0 %v459
    %v478 = vpop.f32.mrf.mxu0
    %v479 = vadd.f32 0.0, %v478
    %480 = vdwg.mxu0
    %v481 = vadd.f32 %v454, %v479
    %v482 = vtanh.pop %v481
    %v483 = vmul.f32 %v482, 0.5
    %v484 = vadd.f32 %v483, 0.5
    %v485 = vmul.f32 %v484, %v383
    %487 = vrot.lane.b32.xlu0 %v482, 32
    %v488 = vpop.permute.xlu0 %487
    %v490 = vmul.f32 %v484, %v488
    %492 = vrot.lane.b32.xlu0 %v490, 32
    %v493 = vpop.permute.xlu0 %492
    %v495 = vadd.f32 %v485, %v493
    %v496 = vtanh.pop %v495
    %498 = vrot.lane.b32.xlu0 %v496, 32
    %v499 = vpop.permute.xlu0 %498
    %v501 = vmul.f32 %v484, %v499
    %502 = vmatpush.msra.mxu0 0.0
    %503 = vmatpush.msra.mxu0 0.0
    %504 = vmatpush.msra.mxu0 0.0
    %505 = vmatpush.msra.mxu0 0.0
    %506 = vmatpush.msra.mxu0 0.0
    %507 = vmatpush.msra.mxu0 0.0
    %508 = vmatpush.msra.mxu0 0.0
    %509 = vmatpush.msra.mxu0 0.0
    %510 = vmatpush.msra.mxu0 0.0
    %511 = vmatpush.msra.mxu0 0.0
    %512 = vmatpush.msra.mxu0 0.0
    %513 = vmatpush.msra.mxu0 0.0
    %514 = vmatpush.msra.mxu0 %v80
    %515 = vmatpush.msra.mxu0 %v79
    %516 = vmatpush.msra.mxu0 %v78
    %517 = vmatpush.msra.mxu0 %v77
    %518 = vmatmul.f32.gmra.mxu0 %v434
    %v519 = vpop.f32.mrf.mxu0
    %v520 = vadd.f32 0.0, %v519
    %521 = vdwg.mxu0
    %v522 = vadd.f32 %v153, %v520
    %v523 = vtanh.pop %v522
    %v524 = vmul.f32 %v523, 0.5
    %v525 = vadd.f32 %v524, 0.5
    %v526 = vmul.f32 %v525, %v424
    %528 = vrot.lane.b32.xlu0 %v523, 32
    %v529 = vpop.permute.xlu0 %528
    %v531 = vmul.f32 %v525, %v529
    %533 = vrot.lane.b32.xlu0 %v531, 32
    %v534 = vpop.permute.xlu0 %533
    %v536 = vadd.f32 %v526, %v534
    %v537 = vtanh.pop %v536
    %539 = vrot.lane.b32.xlu0 %v537, 32
    %v540 = vpop.permute.xlu0 %539
    %v542 = vmul.f32 %v525, %v540
    %544 = vrot.lane.b32.xlu0 %v542, 64
    %v545 = vpop.permute.xlu0 %544
    %v546 = vsel %vm167, %v545, 0
    %548 = vmatpush.msra.mxu0 0.0
    %549 = vmatpush.msra.mxu0 0.0
    %550 = vmatpush.msra.mxu0 0.0
    %551 = vmatpush.msra.mxu0 0.0
    %552 = vmatpush.msra.mxu0 0.0
    %553 = vmatpush.msra.mxu0 0.0
    %554 = vmatpush.msra.mxu0 0.0
    %555 = vmatpush.msra.mxu0 0.0
    %556 = vmatpush.msra.mxu0 0.0
    %557 = vmatpush.msra.mxu0 0.0
    %558 = vmatpush.msra.mxu0 0.0
    %559 = vmatpush.msra.mxu0 0.0
    %560 = vmatpush.msra.mxu0 %v76
    %561 = vmatpush.msra.mxu0 %v75
    %562 = vmatpush.msra.mxu0 %v74
    %563 = vmatpush.msra.mxu0 %v73
    %564 = vmatmul.f32.gmra.mxu0 %v546
    %v565 = vpop.f32.mrf.mxu0
    %v566 = vadd.f32 %v88, %v565
    %567 = vdwg.mxu0
    %569 = vrot.lane.b32.xlu0 %v501, 64
    %v570 = vpop.permute.xlu0 %569
    %v571 = vsel %vm167, %v570, 0
    %573 = vmatpush.msra.mxu0 0.0
    %574 = vmatpush.msra.mxu0 0.0
    %575 = vmatpush.msra.mxu0 0.0
    %576 = vmatpush.msra.mxu0 0.0
    %577 = vmatpush.msra.mxu0 0.0
    %578 = vmatpush.msra.mxu0 0.0
    %579 = vmatpush.msra.mxu0 0.0
    %580 = vmatpush.msra.mxu0 0.0
    %581 = vmatpush.msra.mxu0 0.0
    %582 = vmatpush.msra.mxu0 0.0
    %583 = vmatpush.msra.mxu0 0.0
    %584 = vmatpush.msra.mxu0 0.0
    %585 = vmatpush.msra.mxu0 %v84
    %586 = vmatpush.msra.mxu0 %v83
    %587 = vmatpush.msra.mxu0 %v82
    %588 = vmatpush.msra.mxu0 %v81
    %589 = vmatmul.f32.gmra.mxu0 %v571
    %v590 = vpop.f32.mrf.mxu0
    %v591 = vadd.f32 0.0, %v590
    %592 = vdwg.mxu0
    %v593 = vadd.f32 %v566, %v591
    %v594 = vtanh.pop %v593
    %v595 = vmul.f32 %v594, 0.5
    %v596 = vadd.f32 %v595, 0.5
    %v597 = vmul.f32 %v596, %v495
    %599 = vrot.lane.b32.xlu0 %v594, 32
    %v600 = vpop.permute.xlu0 %599
    %v602 = vmul.f32 %v596, %v600
    %604 = vrot.lane.b32.xlu0 %v602, 32
    %v605 = vpop.permute.xlu0 %604
    %v607 = vadd.f32 %v597, %v605
    %v608 = vtanh.pop %v607
    %610 = vrot.lane.b32.xlu0 %v608, 32
    %v611 = vpop.permute.xlu0 %610
    %v613 = vmul.f32 %v596, %v611
    %614 = vmatpush.msra.mxu0 0.0
    %615 = vmatpush.msra.mxu0 0.0
    %616 = vmatpush.msra.mxu0 0.0
    %617 = vmatpush.msra.mxu0 0.0
    %618 = vmatpush.msra.mxu0 0.0
    %619 = vmatpush.msra.mxu0 0.0
    %620 = vmatpush.msra.mxu0 0.0
    %621 = vmatpush.msra.mxu0 0.0
    %622 = vmatpush.msra.mxu0 0.0
    %623 = vmatpush.msra.mxu0 0.0
    %624 = vmatpush.msra.mxu0 0.0
    %625 = vmatpush.msra.mxu0 0.0
    %626 = vmatpush.msra.mxu0 %v80
    %627 = vmatpush.msra.mxu0 %v79
    %628 = vmatpush.msra.mxu0 %v78
    %629 = vmatpush.msra.mxu0 %v77
    %630 = vmatmul.f32.gmra.mxu0 %v546
    %v631 = vpop.f32.mrf.mxu0
    %v632 = vadd.f32 0.0, %v631
    %633 = vdwg.mxu0
    %v634 = vadd.f32 %v156, %v632
    %v635 = vtanh.pop %v634
    %v636 = vmul.f32 %v635, 0.5
    %v637 = vadd.f32 %v636, 0.5
    %v638 = vmul.f32 %v637, %v536
    %640 = vrot.lane.b32.xlu0 %v635, 32
    %v641 = vpop.permute.xlu0 %640
    %v643 = vmul.f32 %v637, %v641
    %645 = vrot.lane.b32.xlu0 %v643, 32
    %v646 = vpop.permute.xlu0 %645
    %v648 = vadd.f32 %v638, %v646
    %v649 = vtanh.pop %v648
    %651 = vrot.lane.b32.xlu0 %v649, 32
    %v652 = vpop.permute.xlu0 %651
    %v654 = vmul.f32 %v637, %v652
    %656 = vrot.lane.b32.xlu0 %v654, 64
    %v657 = vpop.permute.xlu0 %656
    %v658 = vsel %vm167, %v657, 0
    %660 = vmatpush.msra.mxu0 0.0
    %661 = vmatpush.msra.mxu0 0.0
    %662 = vmatpush.msra.mxu0 0.0
    %663 = vmatpush.msra.mxu0 0.0
    %664 = vmatpush.msra.mxu0 0.0
    %665 = vmatpush.msra.mxu0 0.0
    %666 = vmatpush.msra.mxu0 0.0
    %667 = vmatpush.msra.mxu0 0.0
    %668 = vmatpush.msra.mxu0 0.0
    %669 = vmatpush.msra.mxu0 0.0
    %670 = vmatpush.msra.mxu0 0.0
    %671 = vmatpush.msra.mxu0 0.0
    %672 = vmatpush.msra.mxu0 %v76
    %673 = vmatpush.msra.mxu0 %v75
    %674 = vmatpush.msra.mxu0 %v74
    %675 = vmatpush.msra.mxu0 %v73
    %676 = vmatmul.f32.gmra.mxu0 %v658
    %v677 = vpop.f32.mrf.mxu0
    %v678 = vadd.f32 %v88, %v677
    %679 = vdwg.mxu0
    %681 = vrot.lane.b32.xlu0 %v613, 64
    %v682 = vpop.permute.xlu0 %681
    %v683 = vsel %vm167, %v682, 0
    %685 = vmatpush.msra.mxu0 0.0
    %686 = vmatpush.msra.mxu0 0.0
    %687 = vmatpush.msra.mxu0 0.0
    %688 = vmatpush.msra.mxu0 0.0
    %689 = vmatpush.msra.mxu0 0.0
    %690 = vmatpush.msra.mxu0 0.0
    %691 = vmatpush.msra.mxu0 0.0
    %692 = vmatpush.msra.mxu0 0.0
    %693 = vmatpush.msra.mxu0 0.0
    %694 = vmatpush.msra.mxu0 0.0
    %695 = vmatpush.msra.mxu0 0.0
    %696 = vmatpush.msra.mxu0 0.0
    %697 = vmatpush.msra.mxu0 %v84
    %698 = vmatpush.msra.mxu0 %v83
    %699 = vmatpush.msra.mxu0 %v82
    %700 = vmatpush.msra.mxu0 %v81
    %701 = vmatmul.f32.gmra.mxu0 %v683
    %v702 = vpop.f32.mrf.mxu0
    %v703 = vadd.f32 0.0, %v702
    %704 = vdwg.mxu0
    %v705 = vadd.f32 %v678, %v703
    %v706 = vtanh.pop %v705
    %v707 = vmul.f32 %v706, 0.5
    %v708 = vadd.f32 %v707, 0.5
    %v709 = vmul.f32 %v708, %v607
    %711 = vrot.lane.b32.xlu0 %v706, 32
    %v712 = vpop.permute.xlu0 %711
    %v714 = vmul.f32 %v708, %v712
    %716 = vrot.lane.b32.xlu0 %v714, 32
    %v717 = vpop.permute.xlu0 %716
    %v719 = vadd.f32 %v709, %v717
    %v720 = vtanh.pop %v719
    %722 = vrot.lane.b32.xlu0 %v720, 32
    %v723 = vpop.permute.xlu0 %722
    %v725 = vmul.f32 %v708, %v723
    %726 = vmatpush.msra.mxu0 0.0
    %727 = vmatpush.msra.mxu0 0.0
    %728 = vmatpush.msra.mxu0 0.0
    %729 = vmatpush.msra.mxu0 0.0
    %730 = vmatpush.msra.mxu0 0.0
    %731 = vmatpush.msra.mxu0 0.0
    %732 = vmatpush.msra.mxu0 0.0
    %733 = vmatpush.msra.mxu0 0.0
    %734 = vmatpush.msra.mxu0 0.0
    %735 = vmatpush.msra.mxu0 0.0
    %736 = vmatpush.msra.mxu0 0.0
    %737 = vmatpush.msra.mxu0 0.0
    %738 = vmatpush.msra.mxu0 %v80
    %739 = vmatpush.msra.mxu0 %v79
    %740 = vmatpush.msra.mxu0 %v78
    %741 = vmatpush.msra.mxu0 %v77
    %742 = vmatmul.f32.gmra.mxu0 %v658
    %v743 = vpop.f32.mrf.mxu0
    %v744 = vadd.f32 0.0, %v743
    %745 = vdwg.mxu0
    %v746 = vadd.f32 %v159, %v744
    %v747 = vtanh.pop %v746
    %v748 = vmul.f32 %v747, 0.5
    %v749 = vadd.f32 %v748, 0.5
    %v750 = vmul.f32 %v749, %v648
    %752 = vrot.lane.b32.xlu0 %v747, 32
    %v753 = vpop.permute.xlu0 %752
    %v755 = vmul.f32 %v749, %v753
    %757 = vrot.lane.b32.xlu0 %v755, 32
    %v758 = vpop.permute.xlu0 %757
    %v760 = vadd.f32 %v750, %v758
    %v761 = vtanh.pop %v760
    %763 = vrot.lane.b32.xlu0 %v761, 32
    %v764 = vpop.permute.xlu0 %763
    %v766 = vmul.f32 %v749, %v764
    %768 = vrot.lane.b32.xlu0 %v766, 64
    %v769 = vpop.permute.xlu0 %768
    %v770 = vsel %vm167, %v769, 0
    %772 = vmatpush.msra.mxu0 0.0
    %773 = vmatpush.msra.mxu0 0.0
    %774 = vmatpush.msra.mxu0 0.0
    %775 = vmatpush.msra.mxu0 0.0
    %776 = vmatpush.msra.mxu0 0.0
    %777 = vmatpush.msra.mxu0 0.0
    %778 = vmatpush.msra.mxu0 0.0
    %779 = vmatpush.msra.mxu0 0.0
    %780 = vmatpush.msra.mxu0 0.0
    %781 = vmatpush.msra.mxu0 0.0
    %782 = vmatpush.msra.mxu0 0.0
    %783 = vmatpush.msra.mxu0 0.0
    %784 = vmatpush.msra.mxu0 %v76
    %785 = vmatpush.msra.mxu0 %v75
    %786 = vmatpush.msra.mxu0 %v74
    %787 = vmatpush.msra.mxu0 %v73
    %788 = vmatmul.f32.gmra.mxu0 %v770
    %v789 = vpop.f32.mrf.mxu0
    %v790 = vadd.f32 %v88, %v789
    %791 = vdwg.mxu0
    %793 = vrot.lane.b32.xlu0 %v725, 64
    %v794 = vpop.permute.xlu0 %793
    %v795 = vsel %vm167, %v794, 0
    %797 = vmatpush.msra.mxu0 0.0
    %798 = vmatpush.msra.mxu0 0.0
    %799 = vmatpush.msra.mxu0 0.0
    %800 = vmatpush.msra.mxu0 0.0
    %801 = vmatpush.msra.mxu0 0.0
    %802 = vmatpush.msra.mxu0 0.0
    %803 = vmatpush.msra.mxu0 0.0
    %804 = vmatpush.msra.mxu0 0.0
    %805 = vmatpush.msra.mxu0 0.0
    %806 = vmatpush.msra.mxu0 0.0
    %807 = vmatpush.msra.mxu0 0.0
    %808 = vmatpush.msra.mxu0 0.0
    %809 = vmatpush.msra.mxu0 %v84
    %810 = vmatpush.msra.mxu0 %v83
    %811 = vmatpush.msra.mxu0 %v82
    %812 = vmatpush.msra.mxu0 %v81
    %813 = vmatmul.f32.gmra.mxu0 %v795
    %v814 = vpop.f32.mrf.mxu0
    %v815 = vadd.f32 0.0, %v814
    %816 = vdwg.mxu0
    %v817 = vadd.f32 %v790, %v815
    %v818 = vtanh.pop %v817
    %v819 = vmul.f32 %v818, 0.5
    %v820 = vadd.f32 %v819, 0.5
    %v821 = vmul.f32 %v820, %v719
    %823 = vrot.lane.b32.xlu0 %v818, 32
    %v824 = vpop.permute.xlu0 %823
    %v826 = vmul.f32 %v820, %v824
    %828 = vrot.lane.b32.xlu0 %v826, 32
    %v829 = vpop.permute.xlu0 %828
    %v831 = vadd.f32 %v821, %v829
    %v832 = vtanh.pop %v831
    %834 = vrot.lane.b32.xlu0 %v832, 32
    %v835 = vpop.permute.xlu0 %834
    %v837 = vmul.f32 %v820, %v835
    %838 = vmatpush.msra.mxu0 0.0
    %839 = vmatpush.msra.mxu0 0.0
    %840 = vmatpush.msra.mxu0 0.0
    %841 = vmatpush.msra.mxu0 0.0
    %842 = vmatpush.msra.mxu0 0.0
    %843 = vmatpush.msra.mxu0 0.0
    %844 = vmatpush.msra.mxu0 0.0
    %845 = vmatpush.msra.mxu0 0.0
    %846 = vmatpush.msra.mxu0 0.0
    %847 = vmatpush.msra.mxu0 0.0
    %848 = vmatpush.msra.mxu0 0.0
    %849 = vmatpush.msra.mxu0 0.0
    %850 = vmatpush.msra.mxu0 %v80
    %851 = vmatpush.msra.mxu0 %v79
    %852 = vmatpush.msra.mxu0 %v78
    %853 = vmatpush.msra.mxu0 %v77
    %854 = vmatmul.f32.gmra.mxu0 %v770
    %v855 = vpop.f32.mrf.mxu0
    %v856 = vadd.f32 0.0, %v855
    %857 = vdwg.mxu0
    %v858 = vadd.f32 %v162, %v856
    %v859 = vtanh.pop %v858
    %v860 = vmul.f32 %v859, 0.5
    %v861 = vadd.f32 %v860, 0.5
    %v862 = vmul.f32 %v861, %v760
    %864 = vrot.lane.b32.xlu0 %v859, 32
    %v865 = vpop.permute.xlu0 %864
    %v867 = vmul.f32 %v861, %v865
    %869 = vrot.lane.b32.xlu0 %v867, 32
    %v870 = vpop.permute.xlu0 %869
    %v872 = vadd.f32 %v862, %v870
    %v873 = vtanh.pop %v872
    %875 = vrot.lane.b32.xlu0 %v873, 32
    %v876 = vpop.permute.xlu0 %875
    %v878 = vmul.f32 %v861, %v876
    %880 = vrot.lane.b32.xlu0 %v878, 64
    %v881 = vpop.permute.xlu0 %880
    %v882 = vsel %vm167, %v881, 0
    %884 = vmatpush.msra.mxu0 0.0
    %885 = vmatpush.msra.mxu0 0.0
    %886 = vmatpush.msra.mxu0 0.0
    %887 = vmatpush.msra.mxu0 0.0
    %888 = vmatpush.msra.mxu0 0.0
    %889 = vmatpush.msra.mxu0 0.0
    %890 = vmatpush.msra.mxu0 0.0
    %891 = vmatpush.msra.mxu0 0.0
    %892 = vmatpush.msra.mxu0 0.0
    %893 = vmatpush.msra.mxu0 0.0
    %894 = vmatpush.msra.mxu0 0.0
    %895 = vmatpush.msra.mxu0 0.0
    %896 = vmatpush.msra.mxu0 %v76
    %897 = vmatpush.msra.mxu0 %v75
    %898 = vmatpush.msra.mxu0 %v74
    %899 = vmatpush.msra.mxu0 %v73
    %900 = vmatmul.f32.gmra.mxu0 %v882
    %v901 = vpop.f32.mrf.mxu0
    %v902 = vadd.f32 %v88, %v901
    %903 = vdwg.mxu0
    %905 = vrot.lane.b32.xlu0 %v837, 64
    %v906 = vpop.permute.xlu0 %905
    %v907 = vsel %vm167, %v906, 0
    %909 = vmatpush.msra.mxu0 0.0
    %910 = vmatpush.msra.mxu0 0.0
    %911 = vmatpush.msra.mxu0 0.0
    %912 = vmatpush.msra.mxu0 0.0
    %913 = vmatpush.msra.mxu0 0.0
    %914 = vmatpush.msra.mxu0 0.0
    %915 = vmatpush.msra.mxu0 0.0
    %916 = vmatpush.msra.mxu0 0.0
    %917 = vmatpush.msra.mxu0 0.0
    %918 = vmatpush.msra.mxu0 0.0
    %919 = vmatpush.msra.mxu0 0.0
    %920 = vmatpush.msra.mxu0 0.0
    %921 = vmatpush.msra.mxu0 %v84
    %922 = vmatpush.msra.mxu0 %v83
    %923 = vmatpush.msra.mxu0 %v82
    %924 = vmatpush.msra.mxu0 %v81
    %925 = vmatmul.f32.gmra.mxu0 %v907
    %v926 = vpop.f32.mrf.mxu0
    %v927 = vadd.f32 0.0, %v926
    %928 = vdwg.mxu0
    %v929 = vadd.f32 %v902, %v927
    %v930 = vtanh.pop %v929
    %v931 = vmul.f32 %v930, 0.5
    %v932 = vadd.f32 %v931, 0.5
    %v933 = vmul.f32 %v932, %v831
    %935 = vrot.lane.b32.xlu0 %v930, 32
    %v936 = vpop.permute.xlu0 %935
    %v938 = vmul.f32 %v932, %v936
    %940 = vrot.lane.b32.xlu0 %v938, 32
    %v941 = vpop.permute.xlu0 %940
    %v943 = vadd.f32 %v933, %v941
    %v944 = vtanh.pop %v943
    %946 = vrot.lane.b32.xlu0 %v944, 32
    %v947 = vpop.permute.xlu0 %946
    %v949 = vmul.f32 %v932, %v947
    %950 = vmatpush.msra.mxu0 0.0
    %951 = vmatpush.msra.mxu0 0.0
    %952 = vmatpush.msra.mxu0 0.0
    %953 = vmatpush.msra.mxu0 0.0
    %954 = vmatpush.msra.mxu0 0.0
    %955 = vmatpush.msra.mxu0 0.0
    %956 = vmatpush.msra.mxu0 0.0
    %957 = vmatpush.msra.mxu0 0.0
    %958 = vmatpush.msra.mxu0 0.0
    %959 = vmatpush.msra.mxu0 0.0
    %960 = vmatpush.msra.mxu0 0.0
    %961 = vmatpush.msra.mxu0 0.0
    %962 = vmatpush.msra.mxu0 %v80
    %963 = vmatpush.msra.mxu0 %v79
    %964 = vmatpush.msra.mxu0 %v78
    %965 = vmatpush.msra.mxu0 %v77
    %966 = vmatmul.f32.gmra.mxu0 %v882
    %v967 = vpop.f32.mrf.mxu0
    %v968 = vadd.f32 0.0, %v967
    %969 = vdwg.mxu0
    %v970 = vadd.f32 %v165, %v968
    %v971 = vtanh.pop %v970
    %v972 = vmul.f32 %v971, 0.5
    %v973 = vadd.f32 %v972, 0.5
    %v974 = vmul.f32 %v973, %v872
    %976 = vrot.lane.b32.xlu0 %v971, 32
    %v977 = vpop.permute.xlu0 %976
    %v979 = vmul.f32 %v973, %v977
    %981 = vrot.lane.b32.xlu0 %v979, 32
    %v982 = vpop.permute.xlu0 %981
    %v984 = vadd.f32 %v974, %v982
    %v985 = vtanh.pop %v984
    %987 = vrot.lane.b32.xlu0 %v985, 32
    %v988 = vpop.permute.xlu0 %987
    %v990 = vmul.f32 %v973, %v988
    %992 = vrot.lane.b32.xlu0 %v990, 64
    %v993 = vpop.permute.xlu0 %992
    %v994 = vsel %vm167, %v993, 0
    %996 = vmatpush.msra.mxu0 0.0
    %997 = vmatpush.msra.mxu0 0.0
    %998 = vmatpush.msra.mxu0 0.0
    %999 = vmatpush.msra.mxu0 0.0
    %1000 = vmatpush.msra.mxu0 0.0
    %1001 = vmatpush.msra.mxu0 0.0
    %1002 = vmatpush.msra.mxu0 0.0
    %1003 = vmatpush.msra.mxu0 0.0
    %1004 = vmatpush.msra.mxu0 0.0
    %1005 = vmatpush.msra.mxu0 0.0
    %1006 = vmatpush.msra.mxu0 0.0
    %1007 = vmatpush.msra.mxu0 0.0
    %1008 = vmatpush.msra.mxu0 %v76
    %1009 = vmatpush.msra.mxu0 %v75
    %1010 = vmatpush.msra.mxu0 %v74
    %1011 = vmatpush.msra.mxu0 %v73
    %1012 = vmatmul.f32.gmra.mxu0 %v994
    %v1013 = vpop.f32.mrf.mxu0
    %v1014 = vadd.f32 %v88, %v1013
    %1015 = vdwg.mxu0
    %1017 = vrot.lane.b32.xlu0 %v949, 64
    %v1018 = vpop.permute.xlu0 %1017
    %v1019 = vsel %vm167, %v1018, 0
    %1021 = vmatpush.msra.mxu0 0.0
    %1022 = vmatpush.msra.mxu0 0.0
    %1023 = vmatpush.msra.mxu0 0.0
    %1024 = vmatpush.msra.mxu0 0.0
    %1025 = vmatpush.msra.mxu0 0.0
    %1026 = vmatpush.msra.mxu0 0.0
    %1027 = vmatpush.msra.mxu0 0.0
    %1028 = vmatpush.msra.mxu0 0.0
    %1029 = vmatpush.msra.mxu0 0.0
    %1030 = vmatpush.msra.mxu0 0.0
    %1031 = vmatpush.msra.mxu0 0.0
    %1032 = vmatpush.msra.mxu0 0.0
    %1033 = vmatpush.msra.mxu0 %v84
    %1034 = vmatpush.msra.mxu0 %v83
    %1035 = vmatpush.msra.mxu0 %v82
    %1036 = vmatpush.msra.mxu0 %v81
    %1037 = vmatmul.f32.gmra.mxu0 %v1019
    %v1038 = vpop.f32.mrf.mxu0
    %v1039 = vadd.f32 0.0, %v1038
    %1040 = vdwg.mxu0
    %v1041 = vadd.f32 %v1014, %v1039
    %v1042 = vtanh.pop %v1041
    %v1043 = vmul.f32 %v1042, 0.5
    %v1044 = vadd.f32 %v1043, 0.5
    %v1045 = vmul.f32 %v1044, %v943
    %1047 = vrot.lane.b32.xlu0 %v1042, 32
    %v1048 = vpop.permute.xlu0 %1047
    %v1050 = vmul.f32 %v1044, %v1048
    %1052 = vrot.lane.b32.xlu0 %v1050, 32
    %v1053 = vpop.permute.xlu0 %1052
    %v1055 = vadd.f32 %v1045, %v1053
    %v1056 = vtanh.pop %v1055
    %1058 = vrot.lane.b32.xlu0 %v1056, 32
    %v1059 = vpop.permute.xlu0 %1058
    %v1061 = vmul.f32 %v1044, %v1059
    %v1062 = vld [vmem:[#allocation5] sm:$0xff]
    %v1063 = vld [vmem:[#allocation5 + $0x8] sm:$0xff]
    %v1064 = vld [vmem:[#allocation5 + $0x10] sm:$0xff]
    %v1065 = vld [vmem:[#allocation5 + $0x18] sm:$0xff]
    %v1066 = vld [vmem:[%s8] sm:$0x1]
    %v1068 = vperm.slane %v1066, 0
    %1071 = vrot.lane.b32.xlu0 %v1061, 64
    %v1072 = vpop.permute.xlu0 %1071
    %v1073 = vsel %vm167, %v1072, 0
    %1075 = vmatpush.msra.mxu0 0.0
    %1076 = vmatpush.msra.mxu0 0.0
    %1077 = vmatpush.msra.mxu0 0.0
    %1078 = vmatpush.msra.mxu0 0.0
    %1079 = vmatpush.msra.mxu0 0.0
    %1080 = vmatpush.msra.mxu0 0.0
    %1081 = vmatpush.msra.mxu0 0.0
    %1082 = vmatpush.msra.mxu0 0.0
    %1083 = vmatpush.msra.mxu0 0.0
    %1084 = vmatpush.msra.mxu0 0.0
    %1085 = vmatpush.msra.mxu0 0.0
    %1086 = vmatpush.msra.mxu0 0.0
    %1087 = vmatpush.msra.mxu0 %v1065
    %1088 = vmatpush.msra.mxu0 %v1064
    %1089 = vmatpush.msra.mxu0 %v1063
    %1090 = vmatpush.msra.mxu0 %v1062
    %1091 = vmatmul.f32.gmra.mxu0 %v1073
    %v1092 = vpop.f32.mrf.mxu0
    %v1093 = vadd.f32 %v1068, %v1092
    %1094 = vdwg.mxu0
    %v1095 = vmax.f32 %v1093, 0.0
    %v1096 = vld [vmem:[%s9] sm:$0x1]
    %v1098 = vperm.slane %v1096, 0
    %v1100 = vmul.f32 %v1095, %v1098
    %v1101 = vsel %vm167, %v1100, 0.0
    %1102 = vadd.xlane.f32.xlu0 %v1101
    %v1103 = vpop.xlane.xlu0 %1102
    %v1104 = vld [vmem:[#allocation2] sm:$0x1]
    %v1106 = vperm.slane %v1104, 0
    %v1108 = vadd.f32 %v1103, %v1106
    %vm1109 = vcmask 7168
    %1110 = vst.msk [vmem:[%s11] sm:$0xff] %vm1109, %v1108
    // Predicated region
    $region54: #{tpu_custom_call.1} parent=1 // pred_check
      _
    $region55: #{tpu_custom_call.1} parent=1 // pred_check_branch
      %1112 = sbr.rel (0) target = $region57
    $region56: #{tpu_custom_call.1} parent=1 // pred_region
      _
    $region57: #{tpu_custom_call.1} parent=1 // pred_fallthru
      _
    // Predicated region
    $region58: #{tpu_custom_call.1} parent=1 // pred_check
      _
    $region59: #{tpu_custom_call.1} parent=1 // pred_check_branch
      %1114 = sbr.rel (0) target = $region61
    $region60: #{tpu_custom_call.1} parent=1 // pred_region
      _
    $region61: #{tpu_custom_call.1} parent=1 // pred_fallthru
      _
    %1115 = vsyncpa [#allocation4], 1
    %1116 = vsyncpa [#allocation6], 1

</llo_original>
